<compile_context>
chip_gen: v7x
topology: tpu7x:2x2x1
jax: 0.10.0
libtpu: 0.0.40
codegen_flags: <defaults>
</compile_context>

<pallas_src>
import math

import jax
import jax.numpy as jnp
from jax import lax
from jax.experimental import pallas as pl
from jax.experimental.pallas import tpu as pltpu


def prepare_qkv_params(params, *, num_heads, compute_dtype=jnp.bfloat16):
    """One-time parameter prep (hoist out of the per-forward-call path).

    Builds the fused [Wq | Wk | Wv] weight in [in, out] layout with the
    1/sqrt(head_dim) softmax scale folded into the Q projection weight/bias.
    """
    H = params["wq"].shape[1]
    assert H % num_heads == 0
    head_dim = H // num_heads
    scale = 1.0 / math.sqrt(head_dim)

    wq_t = (params["wq"] * scale).T          # fold softmax scale into Wq
    wk_t = params["wk"].T
    wv_t = params["wv"].T
    bq = params["bq"] * scale                # ... and into bq
    w_qkv = jnp.concatenate([wq_t, wk_t, wv_t], axis=1).astype(compute_dtype)   # (H, 3H)
    b_qkv = jnp.concatenate([bq, params["bk"], params["bv"]],
                            axis=0).reshape(1, 3 * H).astype(jnp.float32)       # (1, 3H)
    return {"w_qkv": w_qkv, "b_qkv": b_qkv}


def _choose_query_tile(S, target=256):
    """Largest multiple-of-8 divisor of S that is <= target (else S itself)."""
    if S <= target:
        return S
    for t in range(target, 7, -8):
        if S % t == 0:
            return t
    return S


def _attention_kernel(num_heads, head_dim, seq_len, q_tile, compute_dtype,
                      approx_softmax):
    H = num_heads * head_dim

    def kernel(x_ref, w_ref, b_ref, o_ref, k_scr, v_scr):
        # x_ref: (1, S, H)   current batch element (compute_dtype), resident over qi
        # w_ref: (H, 3H)     fused [Wq|Wk|Wv] (scale folded into Wq), VMEM-resident
        # b_ref: (1, 3H)     fused bias (f32, scale folded into bq), VMEM-resident
        # o_ref: (1, Tq, H)  this query tile's slice of the context layer
        # k_scr / v_scr: (S, H) scratch holding K / V for this batch element
        qi = pl.program_id(1)
        b = b_ref[0]                                             # (3H,) f32

        # ---- K / V projection: once per batch element (first query tile) ----
        @pl.when(qi == 0)
        def _():
            x = x_ref[0]                                         # (S, H)
            k = jnp.dot(x, w_ref[:, H:2 * H],
                        preferred_element_type=jnp.float32) + b[H:2 * H]
            v = jnp.dot(x, w_ref[:, 2 * H:3 * H],
                        preferred_element_type=jnp.float32) + b[2 * H:3 * H]
            k_scr[...] = k.astype(k_scr.dtype)
            v_scr[...] = v.astype(v_scr.dtype)

        # ---- Q projection for this query tile (scale already folded in) ----
        if q_tile == seq_len:
            xq = x_ref[0]                                        # no tiling
        else:
            q_start = pl.multiple_of(qi * q_tile, q_tile)
            xq = x_ref[0, pl.ds(q_start, q_tile), :]             # (Tq, H)
        qf = jnp.dot(xq, w_ref[:, 0:H],
                     preferred_element_type=jnp.float32) + b[0:H]  # (Tq, H) f32

        kf = k_scr[...]                                          # (S, H) compute_dtype
        vf = v_scr[...]

        # TODO(synk): if the bundle dump shows per-head relayout copies for the
        # head_dim-lane slices below, switch to one batched lax.dot_general over
        # (num_heads, Tq, D) / (num_heads, S, D).
        ctx_heads = []
        for h in range(num_heads):                               # small static unroll
            lo, hi = h * head_dim, (h + 1) * head_dim
            qh = qf[:, lo:hi].astype(compute_dtype)              # (Tq, D)
            kh = kf[:, lo:hi]                                    # (S, D)
            vh = vf[:, lo:hi]                                    # (S, D)

            # scores = Q K^T (NT dot, no transpose; 1/sqrt(D) pre-folded).
            s = lax.dot_general(qh, kh, (((1,), (1,)), ((), ())),
                                preferred_element_type=jnp.float32)  # (Tq, S) f32

            # Numerically stable softmax; normalization deferred until after PV.
            s = s - jnp.max(s, axis=-1, keepdims=True)
            e = jnp.exp(s)                                       # f32
            denom = jnp.sum(e, axis=-1, keepdims=True)           # (Tq, 1) f32
            # TODO(synk): on v6e/v7x consider bf16 exp (2x EUP rate); keep f32 sum.

            ctx_h = jnp.dot(e.astype(compute_dtype), vh,
                            preferred_element_type=jnp.float32)      # (Tq, D) f32
            if approx_softmax:
                ctx_h = ctx_h * pl.reciprocal(denom, approx=True)    # EUP slot
            else:
                ctx_h = ctx_h / denom
            ctx_heads.append(ctx_h)

        ctx = ctx_heads[0] if num_heads == 1 else jnp.concatenate(ctx_heads, axis=-1)
        # Single lane-dense (Tq, H) store: reproduces permute(0,2,1,3).view(B,S,H)
        # for this query tile.
        o_ref[0] = ctx.astype(o_ref.dtype)

    return kernel


def bert_self_attention(hidden_states, params, *, num_heads,
                        compute_dtype=jnp.bfloat16, approx_softmax=False,
                        q_tile_target=256):
    """BertSelfAttention forward (no mask, eval-mode dropout) as a Pallas kernel.

    `params` is either raw nn.Linear-style {wq,wk,wv,bq,bk,bv} or (preferred)
    the output of prepare_qkv_params() so weight prep is hoisted out of the
    per-call path.
    """
    B, S, H = hidden_states.shape
    assert H % num_heads == 0
    head_dim = H // num_heads

    if "w_qkv" not in params:     # convenience path; prefer prepare_qkv_params()
        params = prepare_qkv_params(params, num_heads=num_heads,
                                    compute_dtype=compute_dtype)
    w_qkv, b_qkv = params["w_qkv"], params["b_qkv"]

    q_tile = _choose_query_tile(S, q_tile_target)
    n_q = S // q_tile
    x = hidden_states.astype(compute_dtype)

    kernel = _attention_kernel(num_heads, head_dim, S, q_tile,
                               compute_dtype, approx_softmax)

    # Advisory cost hint for XLA's scheduler.
    flops = 2 * B * S * H * 3 * H + 4 * B * S * S * H
    cost = pl.CostEstimate(
        flops=int(flops),
        transcendentals=int(B * num_heads * S * S),
        bytes_accessed=int(x.size * x.dtype.itemsize
                           + w_qkv.size * w_qkv.dtype.itemsize
                           + b_qkv.size * 4
                           + B * S * H * hidden_states.dtype.itemsize),
    )

    # Per-step VMEM working set: double-buffered pipeline blocks + resident K/V
    # scratch + live f32 intermediates.  Only raise the scoped limit when
    # needed, and never above ~90% of this chip's physical VMEM.
    cd = jnp.dtype(compute_dtype).itemsize
    od = jnp.dtype(hidden_states.dtype).itemsize
    blocks = 2 * (S * H * cd + H * 3 * H * cd + 3 * H * 4 + q_tile * H * od)
    scratch = 2 * S * H * cd
    live = S * H * 4 + 2 * q_tile * H * 4 + 2 * q_tile * S * 4
    vmem_needed = int(1.5 * (blocks + scratch + live))
    try:
        vmem_cap = int(pltpu.get_tpu_info().vmem_capacity_bytes)
    except Exception:
        vmem_cap = 64 * 1024 * 1024        # conservative fallback (v7x per-TC)
    vmem_limit = None
    if vmem_needed > 16 * 1024 * 1024:     # smallest per-chip scoped default (v5e)
        vmem_limit = int(min(max(vmem_needed, 32 * 1024 * 1024),
                             int(0.9 * vmem_cap)))

    out = pl.pallas_call(
        kernel,
        out_shape=jax.ShapeDtypeStruct((B, S, H), hidden_states.dtype),
        grid_spec=pltpu.PrefetchScalarGridSpec(
            num_scalar_prefetch=0,
            grid=(B, n_q),
            in_specs=[
                pl.BlockSpec((1, S, H), lambda bb, qq: (bb, 0, 0)),   # x: per batch elem
                pl.BlockSpec((H, 3 * H), lambda bb, qq: (0, 0)),      # fused W: resident
                pl.BlockSpec((1, 3 * H), lambda bb, qq: (0, 0)),      # fused bias: resident
            ],
            out_specs=pl.BlockSpec((1, q_tile, H), lambda bb, qq: (bb, qq, 0)),
            scratch_shapes=[
                pltpu.VMEM((S, H), compute_dtype),                    # K scratch
                pltpu.VMEM((S, H), compute_dtype),                    # V scratch
            ],
        ),
        compiler_params=pltpu.CompilerParams(
            dimension_semantics=("parallel", "arbitrary"),
            vmem_limit_bytes=vmem_limit,
        ),
        cost_estimate=cost,
    )(x, w_qkv, b_qkv)
    return out


def reference_self_attention(hidden_states, params, *, num_heads):
    """Pure-JAX reference mirroring the PyTorch forward (eval mode, no mask)."""
    B, S, H = hidden_states.shape
    D = H // num_heads

    def linear(x, w, b):  # w: [out, in]
        return x @ w.T + b

    q = linear(hidden_states, params["wq"], params["bq"])
    k = linear(hidden_states, params["wk"], params["bk"])
    v = linear(hidden_states, params["wv"], params["bv"])

    def split_heads(x):  # [B,S,H] -> [B,nh,S,D]
        return x.reshape(B, S, num_heads, D).transpose(0, 2, 1, 3)

    q, k, v = split_heads(q), split_heads(k), split_heads(v)
    scores = jnp.einsum("bhqd,bhkd->bhqk", q, k) / math.sqrt(D)
    probs = jax.nn.softmax(scores, axis=-1)
    ctx = jnp.einsum("bhqk,bhkd->bhqd", probs, v)
    return ctx.transpose(0, 2, 1, 3).reshape(B, S, H)


if __name__ == "__main__":
    # Small config consistent with the module: hidden_size divisible by heads.
    B, S, H, NUM_HEADS = 2, 8, 32, 4

    key = jax.random.PRNGKey(0)
    k_x, k_wq, k_wk, k_wv, k_bq, k_bk, k_bv = jax.random.split(key, 7)

    hidden_states = jax.random.normal(k_x, (B, S, H), dtype=jnp.float32)

    # Deterministic parameter init (nn.Linear-like shapes: weight [out, in]).
    params = {
        "wq": 0.02 * jax.random.normal(k_wq, (H, H), dtype=jnp.float32),
        "wk": 0.02 * jax.random.normal(k_wk, (H, H), dtype=jnp.float32),
        "wv": 0.02 * jax.random.normal(k_wv, (H, H), dtype=jnp.float32),
        "bq": 0.01 * jax.random.normal(k_bq, (H,), dtype=jnp.float32),
        "bk": 0.01 * jax.random.normal(k_bk, (H,), dtype=jnp.float32),
        "bv": 0.01 * jax.random.normal(k_bv, (H,), dtype=jnp.float32),
    }

    ref = reference_self_attention(hidden_states, params, num_heads=NUM_HEADS)

    # 1) Exact-parity path: f32 compute, exact softmax division.
    prep_f32 = prepare_qkv_params(params, num_heads=NUM_HEADS,
                                  compute_dtype=jnp.float32)
    out_f32 = bert_self_attention(hidden_states, prep_f32, num_heads=NUM_HEADS,
                                  compute_dtype=jnp.float32, approx_softmax=False)
    out_f32 = jax.block_until_ready(out_f32)
    assert out_f32.shape == (B, S, H)
    assert jnp.allclose(out_f32, ref, atol=1e-4, rtol=1e-4), "f32 path mismatch"

    # 2) Performance path: bf16 MXU math + approximate EUP reciprocal.
    prep_bf16 = prepare_qkv_params(params, num_heads=NUM_HEADS,
                                   compute_dtype=jnp.bfloat16)
    out_bf16 = bert_self_attention(hidden_states, prep_bf16, num_heads=NUM_HEADS,
                                   compute_dtype=jnp.bfloat16, approx_softmax=True)
    out_bf16 = jax.block_until_ready(out_bf16)
    assert out_bf16.shape == (B, S, H)
    assert jnp.allclose(out_bf16, ref, atol=1e-2, rtol=1e-2), "bf16 path mismatch"

    print("KERNEL_OK")
</pallas_src>

<mosaic_0001>
module attributes {stable_mosaic.version = 11 : i64} {
  func.func @kernel(%arg0: i32, %arg1: i32, %arg2: memref<1x8x32xf32, #tpu.memory_space<vmem>>, %arg3: memref<32x96xf32, #tpu.memory_space<vmem>>, %arg4: memref<1x96xf32, #tpu.memory_space<vmem>>, %arg5: memref<1x8x32xf32, #tpu.memory_space<vmem>>, %arg6: memref<8x32xf32, #tpu.memory_space<vmem>>, %arg7: memref<8x32xf32, #tpu.memory_space<vmem>>) attributes {dimension_semantics = [#tpu.dimension_semantics<parallel>, #tpu.dimension_semantics<arbitrary>], iteration_bounds = array<i64: 2, 1>, scalar_prefetch = 0 : i64, scratch_operands = 2 : i64, tpu.core_type = #tpu.core_type<tc>, window_params = [{transform_indices = @transform_0, window_bounds = array<i64: 1, 8, 32>}, {pipeline_mode = #tpu.pipeline_mode<synchronous>, transform_indices = @transform_1, window_bounds = array<i64: 32, 96>}, {pipeline_mode = #tpu.pipeline_mode<synchronous>, transform_indices = @transform_2, window_bounds = array<i64: 1, 96>}, {transform_indices = @transform_3, window_bounds = array<i64: 1, 8, 32>}]} {
    %c0 = arith.constant 0 : index
    %c0_0 = arith.constant 0 : index
    %0 = vector.load %arg4[%c0, %c0_0] : memref<1x96xf32, #tpu.memory_space<vmem>>, vector<1x96xf32>
    %1 = vector.shape_cast %0 : vector<1x96xf32> to vector<96xf32>
    %c0_i32 = arith.constant 0 : i32
    %2 = arith.cmpi eq, %arg1, %c0_i32 : i32
    %3 = arith.extui %2 : i1 to i32
    %c0_i32_1 = arith.constant 0 : i32
    %4 = arith.cmpi ne, %3, %c0_i32_1 : i32
    scf.if %4 {
      %c0_30 = arith.constant 0 : index
      %c0_31 = arith.constant 0 : index
      %c0_32 = arith.constant 0 : index
      %75 = vector.load %arg2[%c0_30, %c0_31, %c0_32] : memref<1x8x32xf32, #tpu.memory_space<vmem>>, vector<1x8x32xf32>
      %76 = vector.shape_cast %75 : vector<1x8x32xf32> to vector<8x32xf32>
      %c0_33 = arith.constant 0 : index
      %c32 = arith.constant 32 : index
      %77 = vector.load %arg3[%c0_33, %c32] : memref<32x96xf32, #tpu.memory_space<vmem>>, vector<32x32xf32>
      %cst_34 = arith.constant dense<0.000000e+00> : vector<8x32xf32>
      %78 = tpu.matmul %76, %77, %cst_34 {dimension_numbers = #tpu.dot_dimension_numbers<[1], [0], [0], [1], [0, 0, 1, 1], [], []>} : vector<8x32xf32>, vector<32x32xf32>, vector<8x32xf32> -> vector<8x32xf32>
      %79 = vector.extract_strided_slice %1 {offsets = [32], sizes = [32], strides = [1]} : vector<96xf32> to vector<32xf32>
      %80 = vector.shape_cast %79 : vector<32xf32> to vector<1x32xf32>
      %81 = vector.broadcast %80 : vector<1x32xf32> to vector<8x32xf32>
      %82 = arith.addf %78, %81 : vector<8x32xf32>
      %c0_35 = arith.constant 0 : index
      %c64 = arith.constant 64 : index
      %83 = vector.load %arg3[%c0_35, %c64] : memref<32x96xf32, #tpu.memory_space<vmem>>, vector<32x32xf32>
      %cst_36 = arith.constant dense<0.000000e+00> : vector<8x32xf32>
      %84 = tpu.matmul %76, %83, %cst_36 {dimension_numbers = #tpu.dot_dimension_numbers<[1], [0], [0], [1], [0, 0, 1, 1], [], []>} : vector<8x32xf32>, vector<32x32xf32>, vector<8x32xf32> -> vector<8x32xf32>
      %85 = vector.extract_strided_slice %1 {offsets = [64], sizes = [32], strides = [1]} : vector<96xf32> to vector<32xf32>
      %86 = vector.shape_cast %85 : vector<32xf32> to vector<1x32xf32>
      %87 = vector.broadcast %86 : vector<1x32xf32> to vector<8x32xf32>
      %88 = arith.addf %84, %87 : vector<8x32xf32>
      %c0_37 = arith.constant 0 : index
      %c0_38 = arith.constant 0 : index
      %89 = vector.load %arg6[%c0_37, %c0_38] : memref<8x32xf32, #tpu.memory_space<vmem>>, vector<8x32xf32>
      tpu.vector_store %arg6[%c0_37, %c0_38], %82 {strides = array<i32>} : memref<8x32xf32, #tpu.memory_space<vmem>>, vector<8x32xf32>,
      %c0_39 = arith.constant 0 : index
      %c0_40 = arith.constant 0 : index
      %90 = vector.load %arg7[%c0_39, %c0_40] : memref<8x32xf32, #tpu.memory_space<vmem>>, vector<8x32xf32>
      tpu.vector_store %arg7[%c0_39, %c0_40], %88 {strides = array<i32>} : memref<8x32xf32, #tpu.memory_space<vmem>>, vector<8x32xf32>,
    } else {
    }
    %c0_2 = arith.constant 0 : index
    %c0_3 = arith.constant 0 : index
    %c0_4 = arith.constant 0 : index
    %5 = vector.load %arg2[%c0_2, %c0_3, %c0_4] : memref<1x8x32xf32, #tpu.memory_space<vmem>>, vector<1x8x32xf32>
    %6 = vector.shape_cast %5 : vector<1x8x32xf32> to vector<8x32xf32>
    %c0_5 = arith.constant 0 : index
    %c0_6 = arith.constant 0 : index
    %7 = vector.load %arg3[%c0_5, %c0_6] : memref<32x96xf32, #tpu.memory_space<vmem>>, vector<32x32xf32>
    %cst = arith.constant dense<0.000000e+00> : vector<8x32xf32>
    %8 = tpu.matmul %6, %7, %cst {dimension_numbers = #tpu.dot_dimension_numbers<[1], [0], [0], [1], [0, 0, 1, 1], [], []>} : vector<8x32xf32>, vector<32x32xf32>, vector<8x32xf32> -> vector<8x32xf32>
    %9 = vector.extract_strided_slice %1 {offsets = [0], sizes = [32], strides = [1]} : vector<96xf32> to vector<32xf32>
    %10 = vector.shape_cast %9 : vector<32xf32> to vector<1x32xf32>
    %11 = vector.broadcast %10 : vector<1x32xf32> to vector<8x32xf32>
    %12 = arith.addf %8, %11 : vector<8x32xf32>
    %c0_7 = arith.constant 0 : index
    %c0_8 = arith.constant 0 : index
    %13 = vector.load %arg6[%c0_7, %c0_8] : memref<8x32xf32, #tpu.memory_space<vmem>>, vector<8x32xf32>
    %c0_9 = arith.constant 0 : index
    %c0_10 = arith.constant 0 : index
    %14 = vector.load %arg7[%c0_9, %c0_10] : memref<8x32xf32, #tpu.memory_space<vmem>>, vector<8x32xf32>
    %15 = vector.extract_strided_slice %12 {offsets = [0, 0], sizes = [8, 8], strides = [1, 1]} : vector<8x32xf32> to vector<8x8xf32>
    %16 = vector.extract_strided_slice %13 {offsets = [0, 0], sizes = [8, 8], strides = [1, 1]} : vector<8x32xf32> to vector<8x8xf32>
    %17 = vector.extract_strided_slice %14 {offsets = [0, 0], sizes = [8, 8], strides = [1, 1]} : vector<8x32xf32> to vector<8x8xf32>
    %cst_11 = arith.constant dense<0.000000e+00> : vector<8x8xf32>
    %18 = tpu.matmul %15, %16, %cst_11 {dimension_numbers = #tpu.dot_dimension_numbers<[1], [1], [0], [0], [0, 0, 1, 0], [], []>} : vector<8x8xf32>, vector<8x8xf32>, vector<8x8xf32> -> vector<8x8xf32>
    %cst_12 = arith.constant dense<0xFF800000> : vector<8xf32>
    %19 = vector.multi_reduction <maximumf>, %18, %cst_12 [1] : vector<8x8xf32> to vector<8xf32>
    %20 = vector.shape_cast %19 : vector<8xf32> to vector<8x1xf32>
    %21 = vector.broadcast %20 : vector<8x1xf32> to vector<8x8xf32>
    %22 = arith.subf %18, %21 : vector<8x8xf32>
    %23 = math.exp %22 : vector<8x8xf32>
    %cst_13 = arith.constant dense<0.000000e+00> : vector<8xf32>
    %24 = vector.multi_reduction <add>, %23, %cst_13 [1] : vector<8x8xf32> to vector<8xf32>
    %25 = vector.shape_cast %24 : vector<8xf32> to vector<8x1xf32>
    %cst_14 = arith.constant dense<0.000000e+00> : vector<8x8xf32>
    %26 = tpu.matmul %23, %17, %cst_14 {dimension_numbers = #tpu.dot_dimension_numbers<[1], [0], [0], [1], [0, 0, 1, 1], [], []>} : vector<8x8xf32>, vector<8x8xf32>, vector<8x8xf32> -> vector<8x8xf32>
    %27 = vector.broadcast %25 : vector<8x1xf32> to vector<8x8xf32>
    %28 = arith.divf %26, %27 : vector<8x8xf32>
    %29 = vector.extract_strided_slice %12 {offsets = [0, 8], sizes = [8, 8], strides = [1, 1]} : vector<8x32xf32> to vector<8x8xf32>
    %30 = vector.extract_strided_slice %13 {offsets = [0, 8], sizes = [8, 8], strides = [1, 1]} : vector<8x32xf32> to vector<8x8xf32>
    %31 = vector.extract_strided_slice %14 {offsets = [0, 8], sizes = [8, 8], strides = [1, 1]} : vector<8x32xf32> to vector<8x8xf32>
    %cst_15 = arith.constant dense<0.000000e+00> : vector<8x8xf32>
    %32 = tpu.matmul %29, %30, %cst_15 {dimension_numbers = #tpu.dot_dimension_numbers<[1], [1], [0], [0], [0, 0, 1, 0], [], []>} : vector<8x8xf32>, vector<8x8xf32>, vector<8x8xf32> -> vector<8x8xf32>
    %cst_16 = arith.constant dense<0xFF800000> : vector<8xf32>
    %33 = vector.multi_reduction <maximumf>, %32, %cst_16 [1] : vector<8x8xf32> to vector<8xf32>
    %34 = vector.shape_cast %33 : vector<8xf32> to vector<8x1xf32>
    %35 = vector.broadcast %34 : vector<8x1xf32> to vector<8x8xf32>
    %36 = arith.subf %32, %35 : vector<8x8xf32>
    %37 = math.exp %36 : vector<8x8xf32>
    %cst_17 = arith.constant dense<0.000000e+00> : vector<8xf32>
    %38 = vector.multi_reduction <add>, %37, %cst_17 [1] : vector<8x8xf32> to vector<8xf32>
    %39 = vector.shape_cast %38 : vector<8xf32> to vector<8x1xf32>
    %cst_18 = arith.constant dense<0.000000e+00> : vector<8x8xf32>
    %40 = tpu.matmul %37, %31, %cst_18 {dimension_numbers = #tpu.dot_dimension_numbers<[1], [0], [0], [1], [0, 0, 1, 1], [], []>} : vector<8x8xf32>, vector<8x8xf32>, vector<8x8xf32> -> vector<8x8xf32>
    %41 = vector.broadcast %39 : vector<8x1xf32> to vector<8x8xf32>
    %42 = arith.divf %40, %41 : vector<8x8xf32>
    %43 = vector.extract_strided_slice %12 {offsets = [0, 16], sizes = [8, 8], strides = [1, 1]} : vector<8x32xf32> to vector<8x8xf32>
    %44 = vector.extract_strided_slice %13 {offsets = [0, 16], sizes = [8, 8], strides = [1, 1]} : vector<8x32xf32> to vector<8x8xf32>
    %45 = vector.extract_strided_slice %14 {offsets = [0, 16], sizes = [8, 8], strides = [1, 1]} : vector<8x32xf32> to vector<8x8xf32>
    %cst_19 = arith.constant dense<0.000000e+00> : vector<8x8xf32>
    %46 = tpu.matmul %43, %44, %cst_19 {dimension_numbers = #tpu.dot_dimension_numbers<[1], [1], [0], [0], [0, 0, 1, 0], [], []>} : vector<8x8xf32>, vector<8x8xf32>, vector<8x8xf32> -> vector<8x8xf32>
    %cst_20 = arith.constant dense<0xFF800000> : vector<8xf32>
    %47 = vector.multi_reduction <maximumf>, %46, %cst_20 [1] : vector<8x8xf32> to vector<8xf32>
    %48 = vector.shape_cast %47 : vector<8xf32> to vector<8x1xf32>
    %49 = vector.broadcast %48 : vector<8x1xf32> to vector<8x8xf32>
    %50 = arith.subf %46, %49 : vector<8x8xf32>
    %51 = math.exp %50 : vector<8x8xf32>
    %cst_21 = arith.constant dense<0.000000e+00> : vector<8xf32>
    %52 = vector.multi_reduction <add>, %51, %cst_21 [1] : vector<8x8xf32> to vector<8xf32>
    %53 = vector.shape_cast %52 : vector<8xf32> to vector<8x1xf32>
    %cst_22 = arith.constant dense<0.000000e+00> : vector<8x8xf32>
    %54 = tpu.matmul %51, %45, %cst_22 {dimension_numbers = #tpu.dot_dimension_numbers<[1], [0], [0], [1], [0, 0, 1, 1], [], []>} : vector<8x8xf32>, vector<8x8xf32>, vector<8x8xf32> -> vector<8x8xf32>
    %55 = vector.broadcast %53 : vector<8x1xf32> to vector<8x8xf32>
    %56 = arith.divf %54, %55 : vector<8x8xf32>
    %57 = vector.extract_strided_slice %12 {offsets = [0, 24], sizes = [8, 8], strides = [1, 1]} : vector<8x32xf32> to vector<8x8xf32>
    %58 = vector.extract_strided_slice %13 {offsets = [0, 24], sizes = [8, 8], strides = [1, 1]} : vector<8x32xf32> to vector<8x8xf32>
    %59 = vector.extract_strided_slice %14 {offsets = [0, 24], sizes = [8, 8], strides = [1, 1]} : vector<8x32xf32> to vector<8x8xf32>
    %cst_23 = arith.constant dense<0.000000e+00> : vector<8x8xf32>
    %60 = tpu.matmul %57, %58, %cst_23 {dimension_numbers = #tpu.dot_dimension_numbers<[1], [1], [0], [0], [0, 0, 1, 0], [], []>} : vector<8x8xf32>, vector<8x8xf32>, vector<8x8xf32> -> vector<8x8xf32>
    %cst_24 = arith.constant dense<0xFF800000> : vector<8xf32>
    %61 = vector.multi_reduction <maximumf>, %60, %cst_24 [1] : vector<8x8xf32> to vector<8xf32>
    %62 = vector.shape_cast %61 : vector<8xf32> to vector<8x1xf32>
    %63 = vector.broadcast %62 : vector<8x1xf32> to vector<8x8xf32>
    %64 = arith.subf %60, %63 : vector<8x8xf32>
    %65 = math.exp %64 : vector<8x8xf32>
    %cst_25 = arith.constant dense<0.000000e+00> : vector<8xf32>
    %66 = vector.multi_reduction <add>, %65, %cst_25 [1] : vector<8x8xf32> to vector<8xf32>
    %67 = vector.shape_cast %66 : vector<8xf32> to vector<8x1xf32>
    %cst_26 = arith.constant dense<0.000000e+00> : vector<8x8xf32>
    %68 = tpu.matmul %65, %59, %cst_26 {dimension_numbers = #tpu.dot_dimension_numbers<[1], [0], [0], [1], [0, 0, 1, 1], [], []>} : vector<8x8xf32>, vector<8x8xf32>, vector<8x8xf32> -> vector<8x8xf32>
    %69 = vector.broadcast %67 : vector<8x1xf32> to vector<8x8xf32>
    %70 = arith.divf %68, %69 : vector<8x8xf32>
    %71 = tpu.concatenate %28, %42, %56, %70 in 1 : vector<8x8xf32>, vector<8x8xf32>, vector<8x8xf32>, vector<8x8xf32> -> vector<8x32xf32>
    %c0_27 = arith.constant 0 : index
    %c0_28 = arith.constant 0 : index
    %c0_29 = arith.constant 0 : index
    %72 = vector.load %arg5[%c0_27, %c0_28, %c0_29] : memref<1x8x32xf32, #tpu.memory_space<vmem>>, vector<1x8x32xf32>
    %73 = vector.shape_cast %72 : vector<1x8x32xf32> to vector<8x32xf32>
    %74 = vector.shape_cast %71 : vector<8x32xf32> to vector<1x8x32xf32>
    tpu.vector_store %arg5[%c0_27, %c0_28, %c0_29], %74 {strides = array<i32>} : memref<1x8x32xf32, #tpu.memory_space<vmem>>, vector<1x8x32xf32>,
    return
  }
  func.func @transform_0(%arg0: i32, %arg1: i32) -> (i32, i32, i32) {
    %c0_i32 = arith.constant 0 : i32
    %c0_i32_0 = arith.constant 0 : i32
    %c0_i32_1 = arith.constant 0 : i32
    return %arg0, %c0_i32, %c0_i32_0 : i32, i32, i32
  }
  func.func @transform_1(%arg0: i32, %arg1: i32) -> (i32, i32) {
    %c0_i32 = arith.constant 0 : i32
    %c0_i32_0 = arith.constant 0 : i32
    %c0_i32_1 = arith.constant 0 : i32
    return %c0_i32, %c0_i32_0 : i32, i32
  }
  func.func @transform_2(%arg0: i32, %arg1: i32) -> (i32, i32) {
    %c0_i32 = arith.constant 0 : i32
    %c0_i32_0 = arith.constant 0 : i32
    %c0_i32_1 = arith.constant 0 : i32
    return %c0_i32, %c0_i32_0 : i32, i32
  }
  func.func @transform_3(%arg0: i32, %arg1: i32) -> (i32, i32, i32) {
    %c0_i32 = arith.constant 0 : i32
    %c0_i32_0 = arith.constant 0 : i32
    return %arg0, %arg1, %c0_i32 : i32, i32, i32
  }
}

</mosaic_0001>

<llo_original>
// kernel: tpu_custom_call.1
$region0: #{tpu_custom_call.1}
  #allocation0 [shape = 'u32[]', space=smem, size = 0x4, offset = 0x4, fixed_abs, tag = 'smem constant byte address 0x4 - core index']
  #allocation1 [shape = 'u32[144,128]{1,0:T(1,128)}', space=vmem, size = 0x12000, scoped, tag = 'internal scratch']
  #allocation2 [shape = 'f32[8,32]{1,0:T(8,128)}', space=vmem, size = 0x1000, scoped, tag = 'scratch operand']
  #allocation3 [shape = 'f32[8,32]{1,0:T(8,128)}', space=vmem, size = 0x1000, scoped, tag = 'scratch operand']
  %s0 = inlined_call_operand.hbm [shape: f32[2,8,32], index: 0, kind: input, shape index: {}]
  %s1 = inlined_call_operand.hbm [shape: f32[32,96], index: 1, kind: input, shape index: {}]
  %s2 = inlined_call_operand.vmem [shape: f32[1,96], index: 2, kind: input, shape index: {}]
  %s3 = inlined_call_operand.hbm [shape: f32[2,8,32], index: 3, kind: output, shape index: {}]
  %s4 = sld [smem:[#allocation0]]
  $region57: #{tpu_custom_call.1} parent=0
    _
  %s6 = ssub.s32 1, %s4
  %s7 = scalar_select 0, %s6, %s4
  $region1: #{tpu_custom_call.1} parent=0
    #allocation4 [shape = 'u8[8192]{0}', space=vmem, size = 0x2000, scoped, tag = 'input window, operand 0']
    #allocation5 [shape = 's32[2]{0}', space=sflag, size = 0x8, scoped, tag = 'scoped memory for tpu_custom_call.1']
    #allocation6 [shape = 's32[2]{0}', space=sflag, size = 0x8, scoped, tag = 'scoped memory for tpu_custom_call.1']
    #allocation7 [shape = 'u8[16384]{0}', space=vmem, size = 0x4000, scoped, tag = 'input window, operand 1, single buffered']
    #allocation8 [shape = 's32[1]{0}', space=sflag, size = 0x4, scoped, tag = 'scoped memory for tpu_custom_call.1']
    #allocation9 [shape = 'u8[8192]{0}', space=vmem, size = 0x2000, scoped, tag = 'output window, operand 0']
    %8 = vsyncpa [#allocation5], 0
    %s9 = scalar_lea.sflag [#allocation5], 1
    %10 = vsyncpa %s9, 0
    %11 = vsyncpa [#allocation8], 0
    %12 = vsyncpa [#allocation6], 0
    %s13 = scalar_lea.sflag [#allocation6], 1
    %14 = vsyncpa %s13, 0
    loop: start=0, step=1, limit=4
    $region2: #{tpu_custom_call.1} parent=1 // loop_pre_header
      _
    $region3: #{tpu_custom_call.1} parent=1 // loop_header
      %s16 = sphi 0, %s20
      %p17 = scmp.ge.s32.totalorder %s16, 4
      %s23 = sphi 0, %s35
      %s24 = sphi 0, %s31
      %s25 = sphi 0, %s23
      %s26 = sphi 0, %s24
      %s27 = sphi 0, %s25
      %s28 = sphi 0, %s26
      %s38 = sphi 0, %s40
      %s41 = sphi 0, %s38
      %s42 = sphi 0, %s41
      %s58 = sphi 0, %s42
      %s62 = sphi 0, %s62
      %s64 = sphi 0, %s62
      %s65 = sphi 0, %s64
      %s79 = sphi 0, %s65
      %s83 = sphi 0, %s83
      %s85 = sphi 0, %s83
      %s86 = sphi 0, %s85
      %s100 = sphi 0, %s86
      %s108 = sphi 0, %s110
      %s111 = sphi 0, %s108
      %s112 = sphi 0, %s111
      %s128 = sphi 0, %s112
    $region4: #{tpu_custom_call.1} parent=1 // loop_header_branch
      %19 = sbr.rel (%p17) target = $region8
    $region5: #{tpu_custom_call.1} parent=1 // loop_body
      %s21 = ssub.s32 %s16, 1
      %s22 = ssub.s32 %s16, 2
      %s29 = sadd.s32 1, %s24
      %p30 = scmp.ge.s32.totalorder %s29, 1
      %s31 = scalar_select %p30, 0, %s29
      %s32 = sadd.s32 1, %s23
      %s33 = scalar_select %p30, %s32, %s23
      %p34 = scmp.ge.s32.totalorder %s33, 2
      %s35 = scalar_select %p34, 0, %s33
      %s36 = ssub.s32 %s23, %s35
      %p37 = scmp.eq.s32.totalorder %s36, 0
      %s39 = sadd.s32 %s38, 1
      %s40 = scalar_select %p37, %s38, %s39
      %p43 = pneg %p37
      %p44 = scmp.eq.s32.totalorder %s16, 1
      %p45 = por %p43, %p44
      %p46 = scmp.ne.s32.totalorder %s38, %s41
      %p47 = scmp.eq.s32.totalorder %s16, 0
      %p48 = por %p46, %p47
      %p49 = scmp.ne.s32.totalorder %s38, %s41
      %p50 = scmp.eq.s32.totalorder %s21, 1
      %p51 = por %p49, %p50
      %p52 = scmp.ne.s32.totalorder %s41, %s42
      %p53 = scmp.eq.s32.totalorder %s21, 0
      %p54 = por %p52, %p53
      %p55 = scmp.ne.s32.totalorder %s41, %s42
      %p56 = scmp.eq.s32.totalorder %s22, 1
      %p57 = por %p55, %p56
      %p59 = scmp.ne.s32.totalorder %s42, %s58
      %p60 = scmp.eq.s32.totalorder %s22, 0
      %p61 = por %p59, %p60
      %s63 = sadd.s32 %s62, 1
      %p66 = scmp.eq.s32.totalorder %s16, 1
      %p67 = scmp.ne.s32.totalorder %s62, %s64
      %p68 = scmp.eq.s32.totalorder %s16, 0
      %p69 = por %p67, %p68
      %p70 = scmp.ne.s32.totalorder %s62, %s64
      %p71 = scmp.eq.s32.totalorder %s21, 1
      %p72 = por %p70, %p71
      %p73 = scmp.ne.s32.totalorder %s64, %s65
      %p74 = scmp.eq.s32.totalorder %s21, 0
      %p75 = por %p73, %p74
      %p76 = scmp.ne.s32.totalorder %s64, %s65
      %p77 = scmp.eq.s32.totalorder %s22, 1
      %p78 = por %p76, %p77
      %p80 = scmp.ne.s32.totalorder %s65, %s79
      %p81 = scmp.eq.s32.totalorder %s22, 0
      %p82 = por %p80, %p81
      %s84 = sadd.s32 %s83, 1
      %p87 = scmp.eq.s32.totalorder %s16, 1
      %p88 = scmp.ne.s32.totalorder %s83, %s85
      %p89 = scmp.eq.s32.totalorder %s16, 0
      %p90 = por %p88, %p89
      %p91 = scmp.ne.s32.totalorder %s83, %s85
      %p92 = scmp.eq.s32.totalorder %s21, 1
      %p93 = por %p91, %p92
      %p94 = scmp.ne.s32.totalorder %s85, %s86
      %p95 = scmp.eq.s32.totalorder %s21, 0
      %p96 = por %p94, %p95
      %p97 = scmp.ne.s32.totalorder %s85, %s86
      %p98 = scmp.eq.s32.totalorder %s22, 1
      %p99 = por %p97, %p98
      %p101 = scmp.ne.s32.totalorder %s86, %s100
      %p102 = scmp.eq.s32.totalorder %s22, 0
      %p103 = por %p101, %p102
      %s104 = ssub.s32 %s23, %s35
      %s105 = ssub.s32 %s24, %s31
      %s106 = sor.u32 %s104, %s105
      %p107 = scmp.eq.s32.totalorder %s106, 0
      %s109 = sadd.s32 %s108, 1
      %s110 = scalar_select %p107, %s108, %s109
      %p113 = pneg %p107
      %p114 = scmp.eq.s32.totalorder %s16, 1
      %p115 = por %p113, %p114
      %p116 = scmp.ne.s32.totalorder %s108, %s111
      %p117 = scmp.eq.s32.totalorder %s16, 0
      %p118 = por %p116, %p117
      %p119 = scmp.ne.s32.totalorder %s108, %s111
      %p120 = scmp.eq.s32.totalorder %s21, 1
      %p121 = por %p119, %p120
      %p122 = scmp.ne.s32.totalorder %s111, %s112
      %p123 = scmp.eq.s32.totalorder %s21, 0
      %p124 = por %p122, %p123
      %p125 = scmp.ne.s32.totalorder %s111, %s112
      %p126 = scmp.eq.s32.totalorder %s22, 1
      %p127 = por %p125, %p126
      %p129 = scmp.ne.s32.totalorder %s112, %s128
      %p130 = scmp.eq.s32.totalorder %s22, 0
      %p131 = por %p129, %p130
      %p132 = scmp.le.s32.totalorder 1, %s16
      %p133 = scmp.lt.s32.totalorder %s16, 3
      %p134 = pnand %p132, %p133
      %p135 = pneg %p134
      // Predicated region
      $region9: #{tpu_custom_call.1} parent=5 // pred_check
        _
      $region10: #{tpu_custom_call.1} parent=5 // pred_check_branch
        %137 = sbr.rel (%p134) target = $region12
      $region11: #{tpu_custom_call.1} parent=5 // pred_region
        %s138 = ssub.s32 %s16, 1
        // Predicated region
        $region13: #{tpu_custom_call.1} parent=11 // pred_check
          %p139 = pneg %p75
        $region14: #{tpu_custom_call.1} parent=11 // pred_check_branch
          %141 = sbr.rel (%p139) target = $region16
        $region15: #{tpu_custom_call.1} parent=11 // pred_region
          %s143 = ssub.s32 512, 512
          %144 = vsyncadd [#allocation8], %s143
          %s145 = sshll.u32 [#allocation7], 4
          %s146 = int_to_ptr.vmem [resolvable:$true] %s145
          %151 = dma.hbm_to_vmem [thread:$0]  %s1, 512, %s146, [#allocation8], 128, 128, 8
        $region16: #{tpu_custom_call.1} parent=11 // pred_fallthru
          _
        // Predicated region
        $region17: #{tpu_custom_call.1} parent=11 // pred_check
          %p152 = pneg %p96
        $region18: #{tpu_custom_call.1} parent=11 // pred_check_branch
          %154 = sbr.rel (%p152) target = $region20
        $region19: #{tpu_custom_call.1} parent=11 // pred_region
          _
        $region20: #{tpu_custom_call.1} parent=11 // pred_fallthru
          _
      $region12: #{tpu_custom_call.1} parent=5 // pred_fallthru
        _
      %p155 = scmp.lt.s32.totalorder %s16, 2
      // Predicated region
      $region21: #{tpu_custom_call.1} parent=5 // pred_check
        %p156 = pneg %p155
      $region22: #{tpu_custom_call.1} parent=5 // pred_check_branch
        %158 = sbr.rel (%p156) target = $region24
      $region23: #{tpu_custom_call.1} parent=5 // pred_region
        // Predicated region
        $region25: #{tpu_custom_call.1} parent=23 // pred_check
          %p159 = pneg %p48
        $region26: #{tpu_custom_call.1} parent=23 // pred_check_branch
          %161 = sbr.rel (%p159) target = $region28
        $region27: #{tpu_custom_call.1} parent=23 // pred_region
          %s162 = sand.u32 %s38, 1
          %s163 = scalar_lea.sflag [#allocation5], %s162
          %s164 = sand.u32 %s38, 1
          %s165 = smul.addr %s164, 8
          %s166 = scalar_lea.vmem [#allocation4], %s165
          %s168 = ssub.s32 128, 128
          %169 = vsyncadd %s163, %s168
          %s170 = smul.addr %s23, 128
          %s171 = scalar_lea.hbm %s0, %s170
          %s173 = sshll.u32 %s166, 4
          %s174 = int_to_ptr.vmem [resolvable:$true] %s173
          %176 = dma.hbm_to_vmem [thread:$0]  %s171, 128, %s174, %s163
        $region28: #{tpu_custom_call.1} parent=23 // pred_fallthru
          _
      $region24: #{tpu_custom_call.1} parent=5 // pred_fallthru
        _
      %p177 = scmp.le.s32.totalorder 1, %s16
      %p178 = scmp.lt.s32.totalorder %s16, 3
      %p179 = pnand %p177, %p178
      %p180 = pneg %p179
      // Predicated region
      $region29: #{tpu_custom_call.1} parent=5 // pred_check
        _
      $region30: #{tpu_custom_call.1} parent=5 // pred_check_branch
        %182 = sbr.rel (%p179) target = $region32
      $region31: #{tpu_custom_call.1} parent=5 // pred_region
        %s183 = ssub.s32 %s16, 1
        %s184 = sand.u32 %s41, 1
        %s185 = scalar_lea.sflag [#allocation5], %s184
        %s186 = sand.u32 %s41, 1
        %s187 = smul.addr %s186, 8
        %s188 = scalar_lea.vmem [#allocation4], %s187
        // Predicated region
        $region33: #{tpu_custom_call.1} parent=31 // pred_check
          %p189 = pneg %p54
        $region34: #{tpu_custom_call.1} parent=31 // pred_check_branch
          %191 = sbr.rel (%p189) target = $region36
        $region35: #{tpu_custom_call.1} parent=31 // pred_region
          %192 = dma.done %s185, 128
        $region36: #{tpu_custom_call.1} parent=31 // pred_fallthru
          _
        // Predicated region
        $region37: #{tpu_custom_call.1} parent=31 // pred_check
          %p193 = pneg %p75
        $region38: #{tpu_custom_call.1} parent=31 // pred_check_branch
          %195 = sbr.rel (%p193) target = $region40
        $region39: #{tpu_custom_call.1} parent=31 // pred_region
          %196 = dma.done [#allocation8], 512
        $region40: #{tpu_custom_call.1} parent=31 // pred_fallthru
          _
        %s197 = sand.u32 %s41, 1
        %s198 = scalar_lea.sflag [#allocation5], %s197
        %s199 = sand.u32 %s41, 1
        %s200 = smul.addr %s199, 8
        %s201 = scalar_lea.vmem [#allocation4], %s200
        %p202 = pneg %p54
        %p203 = pneg %p51
        %p204 = pneg %p75
        %p205 = pneg %p72
        %p206 = pneg %p96
        %p207 = pneg %p93
        %p208 = pneg %p124
        %p209 = pneg %p121
        %s210 = sand.u32 %s111, 1
        %s211 = scalar_lea.sflag [#allocation6], %s210
        %s212 = sand.u32 %s111, 1
        %s213 = smul.addr %s212, 8
        %s214 = scalar_lea.vmem [#allocation9], %s213
        %v215 = vld [vmem:[%s2] sm:$0x1]
        %p216 = scmp.eq.s32.totalorder %s26, 0
        // Predicated region
        $region41: #{tpu_custom_call.1} parent=31 // pred_check
          %p217 = pneg %p216
        $region42: #{tpu_custom_call.1} parent=31 // pred_check_branch
          %219 = sbr.rel (%p217) target = $region44
        $region43: #{tpu_custom_call.1} parent=31 // pred_region
          %v220 = vld [vmem:[%s188] sm:$0xff]
          %v221 = vld [vmem:[#allocation7] sm:$0xff]
          %v222 = vld [vmem:[#allocation7 + $0x8] sm:$0xff]
          %v223 = vld [vmem:[#allocation7 + $0x10] sm:$0xff]
          %v224 = vld [vmem:[#allocation7 + $0x18] sm:$0xff]
          %v226 = vlaneseq
          %v227 = vshrl.u32 %v226, 7
          %v228 = vsub.s32 0, %v227
          %v229 = vrot.slane %v215, %v228
          %234 = vrot.lane.b32.xlu0 %v221, 96
          %v235 = vpop.permute.xlu0 %234
          %236 = vrot.lane.b32.xlu0 %v222, 96
          %v237 = vpop.permute.xlu0 %236
          %238 = vrot.lane.b32.xlu0 %v223, 96
          %v239 = vpop.permute.xlu0 %238
          %240 = vrot.lane.b32.xlu0 %v224, 96
          %v241 = vpop.permute.xlu0 %240
          %246 = vrot.lane.b32.xlu0 %v229, 96
          %v247 = vpop.permute.xlu0 %246
          %vm249 = vcmask 261120
          %v251 = vsel %vm249, %v220, 0
          %253 = vmatprep.subr.mxu0 0.0
          %254 = vmatpush1.msra.mxu0 %v235
          %255 = vmatprep.subr.mxu0 0.0
          %256 = vmatpush1.msra.mxu0 %v237
          %257 = vmatprep.subr.mxu0 0.0
          %258 = vmatpush1.msra.mxu0 %v239
          %259 = vmatprep.subr.mxu0 0.0
          %260 = vmatpush1.msra.mxu0 %v241
          %261 = vmatprep.subr.mxu0 0.0
          %262 = vmatpush1.msra.mxu0 0.0
          %263 = vmatprep.subr.mxu0 0.0
          %264 = vmatpush1.msra.mxu0 0.0
          %265 = vmatprep.subr.mxu0 0.0
          %266 = vmatpush1.msra.mxu0 0.0
          %267 = vmatprep.subr.mxu0 0.0
          %268 = vmatpush1.msra.mxu0 0.0
          %269 = vmatprep.subr.mxu0 0.0
          %270 = vmatpush1.msra.mxu0 0.0
          %271 = vmatprep.subr.mxu0 0.0
          %272 = vmatpush1.msra.mxu0 0.0
          %273 = vmatprep.subr.mxu0 0.0
          %274 = vmatpush1.msra.mxu0 0.0
          %275 = vmatprep.subr.mxu0 0.0
          %276 = vmatpush1.msra.mxu0 0.0
          %277 = vmatprep.subr.mxu0 0.0
          %278 = vmatpush1.msra.mxu0 0.0
          %279 = vmatprep.subr.mxu0 0.0
          %280 = vmatpush1.msra.mxu0 0.0
          %281 = vmatprep.subr.mxu0 0.0
          %282 = vmatpush1.msra.mxu0 0.0
          %283 = vmatprep.subr.mxu0 0.0
          %284 = vmatpush1.msra.mxu0 0.0
          %285 = vmatprep.subr.mxu0 0.0
          %286 = vmatpush1.msra.mxu0 0.0
          %287 = vmatprep.subr.mxu0 0.0
          %288 = vmatpush1.msra.mxu0 0.0
          %289 = vmatprep.subr.mxu0 0.0
          %290 = vmatpush1.msra.mxu0 0.0
          %291 = vmatprep.subr.mxu0 0.0
          %292 = vmatpush1.msra.mxu0 0.0
          %293 = vmatprep.subr.mxu0 0.0
          %294 = vmatpush1.msra.mxu0 0.0
          %295 = vmatprep.subr.mxu0 0.0
          %296 = vmatpush1.msra.mxu0 0.0
          %297 = vmatprep.subr.mxu0 0.0
          %298 = vmatpush1.msra.mxu0 0.0
          %299 = vmatprep.subr.mxu0 0.0
          %300 = vmatpush1.msra.mxu0 0.0
          %301 = vmatprep.subr.mxu0 0.0
          %302 = vmatpush1.msra.mxu0 0.0
          %303 = vmatprep.subr.mxu0 0.0
          %304 = vmatpush1.msra.mxu0 0.0
          %305 = vmatprep.subr.mxu0 0.0
          %306 = vmatpush1.msra.mxu0 0.0
          %307 = vmatprep.subr.mxu0 0.0
          %308 = vmatpush1.msra.mxu0 0.0
          %309 = vmatprep.subr.mxu0 0.0
          %310 = vmatpush1.msra.mxu0 0.0
          %311 = vmatprep.subr.mxu0 0.0
          %312 = vmatpush1.msra.mxu0 0.0
          %313 = vmatprep.subr.mxu0 0.0
          %314 = vmatpush1.msra.mxu0 0.0
          %315 = vmatprep.subr.mxu0 0.0
          %316 = vmatpush1.msra.mxu0 0.0
          %317 = vmatprep.mubr.f32.mxu0 0.0
          %318 = vmatmul.mubr.f32.gmra.mrb[0].mxu0 %v251
          %v319 = vpop.f32.mrb[0].mxu0
          %v320 = vadd.f32 %v247, %v319
          %v321 = vpop.f32.mrb[0].mxu0
          %322 = vdwg.mxu0
          %323 = vrot.lane.b32.xlu0 %v221, 64
          %v324 = vpop.permute.xlu0 %323
          %325 = vrot.lane.b32.xlu0 %v222, 64
          %v326 = vpop.permute.xlu0 %325
          %327 = vrot.lane.b32.xlu0 %v223, 64
          %v328 = vpop.permute.xlu0 %327
          %329 = vrot.lane.b32.xlu0 %v224, 64
          %v330 = vpop.permute.xlu0 %329
          %335 = vrot.lane.b32.xlu0 %v229, 64
          %v336 = vpop.permute.xlu0 %335
          %338 = vmatprep.subr.mxu0 0.0
          %339 = vmatpush1.msra.mxu0 %v324
          %340 = vmatprep.subr.mxu0 0.0
          %341 = vmatpush1.msra.mxu0 %v326
          %342 = vmatprep.subr.mxu0 0.0
          %343 = vmatpush1.msra.mxu0 %v328
          %344 = vmatprep.subr.mxu0 0.0
          %345 = vmatpush1.msra.mxu0 %v330
          %346 = vmatprep.subr.mxu0 0.0
          %347 = vmatpush1.msra.mxu0 0.0
          %348 = vmatprep.subr.mxu0 0.0
          %349 = vmatpush1.msra.mxu0 0.0
          %350 = vmatprep.subr.mxu0 0.0
          %351 = vmatpush1.msra.mxu0 0.0
          %352 = vmatprep.subr.mxu0 0.0
          %353 = vmatpush1.msra.mxu0 0.0
          %354 = vmatprep.subr.mxu0 0.0
          %355 = vmatpush1.msra.mxu0 0.0
          %356 = vmatprep.subr.mxu0 0.0
          %357 = vmatpush1.msra.mxu0 0.0
          %358 = vmatprep.subr.mxu0 0.0
          %359 = vmatpush1.msra.mxu0 0.0
          %360 = vmatprep.subr.mxu0 0.0
          %361 = vmatpush1.msra.mxu0 0.0
          %362 = vmatprep.subr.mxu0 0.0
          %363 = vmatpush1.msra.mxu0 0.0
          %364 = vmatprep.subr.mxu0 0.0
          %365 = vmatpush1.msra.mxu0 0.0
          %366 = vmatprep.subr.mxu0 0.0
          %367 = vmatpush1.msra.mxu0 0.0
          %368 = vmatprep.subr.mxu0 0.0
          %369 = vmatpush1.msra.mxu0 0.0
          %370 = vmatprep.subr.mxu0 0.0
          %371 = vmatpush1.msra.mxu0 0.0
          %372 = vmatprep.subr.mxu0 0.0
          %373 = vmatpush1.msra.mxu0 0.0
          %374 = vmatprep.subr.mxu0 0.0
          %375 = vmatpush1.msra.mxu0 0.0
          %376 = vmatprep.subr.mxu0 0.0
          %377 = vmatpush1.msra.mxu0 0.0
          %378 = vmatprep.subr.mxu0 0.0
          %379 = vmatpush1.msra.mxu0 0.0
          %380 = vmatprep.subr.mxu0 0.0
          %381 = vmatpush1.msra.mxu0 0.0
          %382 = vmatprep.subr.mxu0 0.0
          %383 = vmatpush1.msra.mxu0 0.0
          %384 = vmatprep.subr.mxu0 0.0
          %385 = vmatpush1.msra.mxu0 0.0
          %386 = vmatprep.subr.mxu0 0.0
          %387 = vmatpush1.msra.mxu0 0.0
          %388 = vmatprep.subr.mxu0 0.0
          %389 = vmatpush1.msra.mxu0 0.0
          %390 = vmatprep.subr.mxu0 0.0
          %391 = vmatpush1.msra.mxu0 0.0
          %392 = vmatprep.subr.mxu0 0.0
          %393 = vmatpush1.msra.mxu0 0.0
          %394 = vmatprep.subr.mxu0 0.0
          %395 = vmatpush1.msra.mxu0 0.0
          %396 = vmatprep.subr.mxu0 0.0
          %397 = vmatpush1.msra.mxu0 0.0
          %398 = vmatprep.subr.mxu0 0.0
          %399 = vmatpush1.msra.mxu0 0.0
          %400 = vmatprep.subr.mxu0 0.0
          %401 = vmatpush1.msra.mxu0 0.0
          %402 = vmatprep.mubr.f32.mxu0 0.0
          %403 = vmatmul.mubr.f32.gmra.mrb[0].mxu0 %v251
          %v404 = vpop.f32.mrb[0].mxu0
          %v405 = vadd.f32 %v336, %v404
          %v406 = vpop.f32.mrb[0].mxu0
          %407 = vdwg.mxu0
          %408 = vst.msk [vmem:[#allocation2] sm:$0xff] %vm249, %v320
          %409 = vst.msk [vmem:[#allocation3] sm:$0xff] %vm249, %v405
        $region44: #{tpu_custom_call.1} parent=31 // pred_fallthru
          _
        %v410 = vld [vmem:[%s188] sm:$0xff]
        %v411 = vld [vmem:[#allocation7] sm:$0xff]
        %v412 = vld [vmem:[#allocation7 + $0x8] sm:$0xff]
        %v413 = vld [vmem:[#allocation7 + $0x10] sm:$0xff]
        %v414 = vld [vmem:[#allocation7 + $0x18] sm:$0xff]
        %v416 = vlaneseq
        %v417 = vshrl.u32 %v416, 7
        %v418 = vsub.s32 0, %v417
        %v419 = vrot.slane %v215, %v418
        %vm421 = vcmask 261120
        %v423 = vsel %vm421, %v410, 0
        %425 = vmatprep.subr.mxu0 0.0
        %426 = vmatpush1.msra.mxu0 %v411
        %427 = vmatprep.subr.mxu0 0.0
        %428 = vmatpush1.msra.mxu0 %v412
        %429 = vmatprep.subr.mxu0 0.0
        %430 = vmatpush1.msra.mxu0 %v413
        %431 = vmatprep.subr.mxu0 0.0
        %432 = vmatpush1.msra.mxu0 %v414
        %433 = vmatprep.subr.mxu0 0.0
        %434 = vmatpush1.msra.mxu0 0.0
        %435 = vmatprep.subr.mxu0 0.0
        %436 = vmatpush1.msra.mxu0 0.0
        %437 = vmatprep.subr.mxu0 0.0
        %438 = vmatpush1.msra.mxu0 0.0
        %439 = vmatprep.subr.mxu0 0.0
        %440 = vmatpush1.msra.mxu0 0.0
        %441 = vmatprep.subr.mxu0 0.0
        %442 = vmatpush1.msra.mxu0 0.0
        %443 = vmatprep.subr.mxu0 0.0
        %444 = vmatpush1.msra.mxu0 0.0
        %445 = vmatprep.subr.mxu0 0.0
        %446 = vmatpush1.msra.mxu0 0.0
        %447 = vmatprep.subr.mxu0 0.0
        %448 = vmatpush1.msra.mxu0 0.0
        %449 = vmatprep.subr.mxu0 0.0
        %450 = vmatpush1.msra.mxu0 0.0
        %451 = vmatprep.subr.mxu0 0.0
        %452 = vmatpush1.msra.mxu0 0.0
        %453 = vmatprep.subr.mxu0 0.0
        %454 = vmatpush1.msra.mxu0 0.0
        %455 = vmatprep.subr.mxu0 0.0
        %456 = vmatpush1.msra.mxu0 0.0
        %457 = vmatprep.subr.mxu0 0.0
        %458 = vmatpush1.msra.mxu0 0.0
        %459 = vmatprep.subr.mxu0 0.0
        %460 = vmatpush1.msra.mxu0 0.0
        %461 = vmatprep.subr.mxu0 0.0
        %462 = vmatpush1.msra.mxu0 0.0
        %463 = vmatprep.subr.mxu0 0.0
        %464 = vmatpush1.msra.mxu0 0.0
        %465 = vmatprep.subr.mxu0 0.0
        %466 = vmatpush1.msra.mxu0 0.0
        %467 = vmatprep.subr.mxu0 0.0
        %468 = vmatpush1.msra.mxu0 0.0
        %469 = vmatprep.subr.mxu0 0.0
        %470 = vmatpush1.msra.mxu0 0.0
        %471 = vmatprep.subr.mxu0 0.0
        %472 = vmatpush1.msra.mxu0 0.0
        %473 = vmatprep.subr.mxu0 0.0
        %474 = vmatpush1.msra.mxu0 0.0
        %475 = vmatprep.subr.mxu0 0.0
        %476 = vmatpush1.msra.mxu0 0.0
        %477 = vmatprep.subr.mxu0 0.0
        %478 = vmatpush1.msra.mxu0 0.0
        %479 = vmatprep.subr.mxu0 0.0
        %480 = vmatpush1.msra.mxu0 0.0
        %481 = vmatprep.subr.mxu0 0.0
        %482 = vmatpush1.msra.mxu0 0.0
        %483 = vmatprep.subr.mxu0 0.0
        %484 = vmatpush1.msra.mxu0 0.0
        %485 = vmatprep.subr.mxu0 0.0
        %486 = vmatpush1.msra.mxu0 0.0
        %487 = vmatprep.subr.mxu0 0.0
        %488 = vmatpush1.msra.mxu0 0.0
        %489 = vmatprep.mubr.f32.mxu0 0.0
        %490 = vmatmul.mubr.f32.gmra.mrb[0].mxu0 %v423
        %v491 = vpop.f32.mrb[0].mxu0
        %v492 = vadd.f32 %v419, %v491
        %v493 = vpop.f32.mrb[0].mxu0
        %494 = vdwg.mxu0
        %v495 = vld [vmem:[#allocation2] sm:$0xff]
        %v496 = vld [vmem:[#allocation3] sm:$0xff]
        %vm497 = vcmask 64512
        %v499 = vsel %vm497, %v492, 0
        %v502 = vsel %vm497, %v495, 0
        %504 = vmatprep.subr.mxu0 0.0
        %505 = vmatpush1.xpose.msra.mxu0 %v502
        %506 = vmatprep.subr.mxu0 0.0
        %507 = vmatpush1.xpose.msra.mxu0 0.0
        %508 = vmatprep.subr.mxu0 0.0
        %509 = vmatpush1.xpose.msra.mxu0 0.0
        %510 = vmatprep.subr.mxu0 0.0
        %511 = vmatpush1.xpose.msra.mxu0 0.0
        %512 = vmatprep.subr.mxu0 0.0
        %513 = vmatpush1.xpose.msra.mxu0 0.0
        %514 = vmatprep.subr.mxu0 0.0
        %515 = vmatpush1.xpose.msra.mxu0 0.0
        %516 = vmatprep.subr.mxu0 0.0
        %517 = vmatpush1.xpose.msra.mxu0 0.0
        %518 = vmatprep.subr.mxu0 0.0
        %519 = vmatpush1.xpose.msra.mxu0 0.0
        %520 = vmatprep.subr.mxu0 0.0
        %521 = vmatpush1.xpose.msra.mxu0 0.0
        %522 = vmatprep.subr.mxu0 0.0
        %523 = vmatpush1.xpose.msra.mxu0 0.0
        %524 = vmatprep.subr.mxu0 0.0
        %525 = vmatpush1.xpose.msra.mxu0 0.0
        %526 = vmatprep.subr.mxu0 0.0
        %527 = vmatpush1.xpose.msra.mxu0 0.0
        %528 = vmatprep.subr.mxu0 0.0
        %529 = vmatpush1.xpose.msra.mxu0 0.0
        %530 = vmatprep.subr.mxu0 0.0
        %531 = vmatpush1.xpose.msra.mxu0 0.0
        %532 = vmatprep.subr.mxu0 0.0
        %533 = vmatpush1.xpose.msra.mxu0 0.0
        %534 = vmatprep.subr.mxu0 0.0
        %535 = vmatpush1.xpose.msra.mxu0 0.0
        %536 = vmatprep.subr.mxu0 0.0
        %537 = vmatpush1.xpose.msra.mxu0 0.0
        %538 = vmatprep.subr.mxu0 0.0
        %539 = vmatpush1.xpose.msra.mxu0 0.0
        %540 = vmatprep.subr.mxu0 0.0
        %541 = vmatpush1.xpose.msra.mxu0 0.0
        %542 = vmatprep.subr.mxu0 0.0
        %543 = vmatpush1.xpose.msra.mxu0 0.0
        %544 = vmatprep.subr.mxu0 0.0
        %545 = vmatpush1.xpose.msra.mxu0 0.0
        %546 = vmatprep.subr.mxu0 0.0
        %547 = vmatpush1.xpose.msra.mxu0 0.0
        %548 = vmatprep.subr.mxu0 0.0
        %549 = vmatpush1.xpose.msra.mxu0 0.0
        %550 = vmatprep.subr.mxu0 0.0
        %551 = vmatpush1.xpose.msra.mxu0 0.0
        %552 = vmatprep.subr.mxu0 0.0
        %553 = vmatpush1.xpose.msra.mxu0 0.0
        %554 = vmatprep.subr.mxu0 0.0
        %555 = vmatpush1.xpose.msra.mxu0 0.0
        %556 = vmatprep.subr.mxu0 0.0
        %557 = vmatpush1.xpose.msra.mxu0 0.0
        %558 = vmatprep.subr.mxu0 0.0
        %559 = vmatpush1.xpose.msra.mxu0 0.0
        %560 = vmatprep.subr.mxu0 0.0
        %561 = vmatpush1.xpose.msra.mxu0 0.0
        %562 = vmatprep.subr.mxu0 0.0
        %563 = vmatpush1.xpose.msra.mxu0 0.0
        %564 = vmatprep.subr.mxu0 0.0
        %565 = vmatpush1.xpose.msra.mxu0 0.0
        %566 = vmatprep.subr.mxu0 0.0
        %567 = vmatpush1.xpose.msra.mxu0 0.0
        %568 = vmatprep.mubr.f32.mxu0 0.0
        %569 = vmatmul.mubr.f32.gmra.mrb[0].mxu0 %v499
        %v570 = vpop.f32.mrb[0].mxu0
        %v571 = vadd.f32 0.0, %v570
        %v572 = vpop.f32.mrb[0].mxu0
        %573 = vdwg.mxu0
        %v574 = vsel %vm497, %v571, -inf
        %575 = vmax.xlane.f32.xlu0 %v574
        %v576 = vpop.xlane.xlu0 %575
        %v577 = vsub.f32 %v571, %v576
        %v578 = vmul.f32 %v577, 1.442695
        %v579 = vpow.pop %v578
        %v580 = vsel %vm497, %v579, 0.0
        %581 = vadd.xlane.f32.xlu0 %v580
        %v582 = vpop.xlane.xlu0 %581
        %v584 = vsel %vm497, %v579, 0
        %586 = vmatprep.subr.mxu0 0.0
        %587 = vmatpush1.msra.mxu0 %v496
        %588 = vmatprep.subr.mxu0 0.0
        %589 = vmatpush1.msra.mxu0 0.0
        %590 = vmatprep.subr.mxu0 0.0
        %591 = vmatpush1.msra.mxu0 0.0
        %592 = vmatprep.subr.mxu0 0.0
        %593 = vmatpush1.msra.mxu0 0.0
        %594 = vmatprep.subr.mxu0 0.0
        %595 = vmatpush1.msra.mxu0 0.0
        %596 = vmatprep.subr.mxu0 0.0
        %597 = vmatpush1.msra.mxu0 0.0
        %598 = vmatprep.subr.mxu0 0.0
        %599 = vmatpush1.msra.mxu0 0.0
        %600 = vmatprep.subr.mxu0 0.0
        %601 = vmatpush1.msra.mxu0 0.0
        %602 = vmatprep.subr.mxu0 0.0
        %603 = vmatpush1.msra.mxu0 0.0
        %604 = vmatprep.subr.mxu0 0.0
        %605 = vmatpush1.msra.mxu0 0.0
        %606 = vmatprep.subr.mxu0 0.0
        %607 = vmatpush1.msra.mxu0 0.0
        %608 = vmatprep.subr.mxu0 0.0
        %609 = vmatpush1.msra.mxu0 0.0
        %610 = vmatprep.subr.mxu0 0.0
        %611 = vmatpush1.msra.mxu0 0.0
        %612 = vmatprep.subr.mxu0 0.0
        %613 = vmatpush1.msra.mxu0 0.0
        %614 = vmatprep.subr.mxu0 0.0
        %615 = vmatpush1.msra.mxu0 0.0
        %616 = vmatprep.subr.mxu0 0.0
        %617 = vmatpush1.msra.mxu0 0.0
        %618 = vmatprep.subr.mxu0 0.0
        %619 = vmatpush1.msra.mxu0 0.0
        %620 = vmatprep.subr.mxu0 0.0
        %621 = vmatpush1.msra.mxu0 0.0
        %622 = vmatprep.subr.mxu0 0.0
        %623 = vmatpush1.msra.mxu0 0.0
        %624 = vmatprep.subr.mxu0 0.0
        %625 = vmatpush1.msra.mxu0 0.0
        %626 = vmatprep.subr.mxu0 0.0
        %627 = vmatpush1.msra.mxu0 0.0
        %628 = vmatprep.subr.mxu0 0.0
        %629 = vmatpush1.msra.mxu0 0.0
        %630 = vmatprep.subr.mxu0 0.0
        %631 = vmatpush1.msra.mxu0 0.0
        %632 = vmatprep.subr.mxu0 0.0
        %633 = vmatpush1.msra.mxu0 0.0
        %634 = vmatprep.subr.mxu0 0.0
        %635 = vmatpush1.msra.mxu0 0.0
        %636 = vmatprep.subr.mxu0 0.0
        %637 = vmatpush1.msra.mxu0 0.0
        %638 = vmatprep.subr.mxu0 0.0
        %639 = vmatpush1.msra.mxu0 0.0
        %640 = vmatprep.subr.mxu0 0.0
        %641 = vmatpush1.msra.mxu0 0.0
        %642 = vmatprep.subr.mxu0 0.0
        %643 = vmatpush1.msra.mxu0 0.0
        %644 = vmatprep.subr.mxu0 0.0
        %645 = vmatpush1.msra.mxu0 0.0
        %646 = vmatprep.subr.mxu0 0.0
        %647 = vmatpush1.msra.mxu0 0.0
        %648 = vmatprep.subr.mxu0 0.0
        %649 = vmatpush1.msra.mxu0 0.0
        %650 = vmatprep.mubr.f32.mxu0 0.0
        %651 = vmatmul.mubr.f32.gmra.mrb[0].mxu0 %v584
        %v652 = vpop.f32.mrb[0].mxu0
        %v653 = vadd.f32 0.0, %v652
        %v654 = vpop.f32.mrb[0].mxu0
        %655 = vdwg.mxu0
        %v656 = vrcp.pop %v582
        %v657 = vmul.f32 %v653, %v656
        %658 = vrot.lane.b32.xlu0 %v492, 120
        %v659 = vpop.permute.xlu0 %658
        %660 = vrot.lane.b32.xlu0 %v495, 120
        %v661 = vpop.permute.xlu0 %660
        %v662 = vsel %vm497, %v659, 0
        %v664 = vsel %vm497, %v661, 0
        %666 = vmatprep.subr.mxu0 0.0
        %667 = vmatpush1.xpose.msra.mxu0 %v664
        %668 = vmatprep.subr.mxu0 0.0
        %669 = vmatpush1.xpose.msra.mxu0 0.0
        %670 = vmatprep.subr.mxu0 0.0
        %671 = vmatpush1.xpose.msra.mxu0 0.0
        %672 = vmatprep.subr.mxu0 0.0
        %673 = vmatpush1.xpose.msra.mxu0 0.0
        %674 = vmatprep.subr.mxu0 0.0
        %675 = vmatpush1.xpose.msra.mxu0 0.0
        %676 = vmatprep.subr.mxu0 0.0
        %677 = vmatpush1.xpose.msra.mxu0 0.0
        %678 = vmatprep.subr.mxu0 0.0
        %679 = vmatpush1.xpose.msra.mxu0 0.0
        %680 = vmatprep.subr.mxu0 0.0
        %681 = vmatpush1.xpose.msra.mxu0 0.0
        %682 = vmatprep.subr.mxu0 0.0
        %683 = vmatpush1.xpose.msra.mxu0 0.0
        %684 = vmatprep.subr.mxu0 0.0
        %685 = vmatpush1.xpose.msra.mxu0 0.0
        %686 = vmatprep.subr.mxu0 0.0
        %687 = vmatpush1.xpose.msra.mxu0 0.0
        %688 = vmatprep.subr.mxu0 0.0
        %689 = vmatpush1.xpose.msra.mxu0 0.0
        %690 = vmatprep.subr.mxu0 0.0
        %691 = vmatpush1.xpose.msra.mxu0 0.0
        %692 = vmatprep.subr.mxu0 0.0
        %693 = vmatpush1.xpose.msra.mxu0 0.0
        %694 = vmatprep.subr.mxu0 0.0
        %695 = vmatpush1.xpose.msra.mxu0 0.0
        %696 = vmatprep.subr.mxu0 0.0
        %697 = vmatpush1.xpose.msra.mxu0 0.0
        %698 = vmatprep.subr.mxu0 0.0
        %699 = vmatpush1.xpose.msra.mxu0 0.0
        %700 = vmatprep.subr.mxu0 0.0
        %701 = vmatpush1.xpose.msra.mxu0 0.0
        %702 = vmatprep.subr.mxu0 0.0
        %703 = vmatpush1.xpose.msra.mxu0 0.0
        %704 = vmatprep.subr.mxu0 0.0
        %705 = vmatpush1.xpose.msra.mxu0 0.0
        %706 = vmatprep.subr.mxu0 0.0
        %707 = vmatpush1.xpose.msra.mxu0 0.0
        %708 = vmatprep.subr.mxu0 0.0
        %709 = vmatpush1.xpose.msra.mxu0 0.0
        %710 = vmatprep.subr.mxu0 0.0
        %711 = vmatpush1.xpose.msra.mxu0 0.0
        %712 = vmatprep.subr.mxu0 0.0
        %713 = vmatpush1.xpose.msra.mxu0 0.0
        %714 = vmatprep.subr.mxu0 0.0
        %715 = vmatpush1.xpose.msra.mxu0 0.0
        %716 = vmatprep.subr.mxu0 0.0
        %717 = vmatpush1.xpose.msra.mxu0 0.0
        %718 = vmatprep.subr.mxu0 0.0
        %719 = vmatpush1.xpose.msra.mxu0 0.0
        %720 = vmatprep.subr.mxu0 0.0
        %721 = vmatpush1.xpose.msra.mxu0 0.0
        %722 = vmatprep.subr.mxu0 0.0
        %723 = vmatpush1.xpose.msra.mxu0 0.0
        %724 = vmatprep.subr.mxu0 0.0
        %725 = vmatpush1.xpose.msra.mxu0 0.0
        %726 = vmatprep.subr.mxu0 0.0
        %727 = vmatpush1.xpose.msra.mxu0 0.0
        %728 = vmatprep.subr.mxu0 0.0
        %729 = vmatpush1.xpose.msra.mxu0 0.0
        %730 = vmatprep.mubr.f32.mxu0 0.0
        %731 = vmatmul.mubr.f32.gmra.mrb[0].mxu0 %v662
        %v732 = vpop.f32.mrb[0].mxu0
        %v733 = vadd.f32 0.0, %v732
        %v734 = vpop.f32.mrb[0].mxu0
        %735 = vdwg.mxu0
        %v736 = vsel %vm497, %v733, -inf
        %737 = vmax.xlane.f32.xlu0 %v736
        %v738 = vpop.xlane.xlu0 %737
        %v739 = vsub.f32 %v733, %v738
        %v740 = vmul.f32 %v739, 1.442695
        %v741 = vpow.pop %v740
        %v742 = vsel %vm497, %v741, 0.0
        %743 = vadd.xlane.f32.xlu0 %v742
        %v744 = vpop.xlane.xlu0 %743
        %746 = vrot.lane.b32.xlu0 %v496, 120
        %v747 = vpop.permute.xlu0 %746
        %v750 = vsel %vm497, %v741, 0
        %752 = vmatprep.subr.mxu0 0.0
        %753 = vmatpush1.msra.mxu0 %v747
        %754 = vmatprep.subr.mxu0 0.0
        %755 = vmatpush1.msra.mxu0 0.0
        %756 = vmatprep.subr.mxu0 0.0
        %757 = vmatpush1.msra.mxu0 0.0
        %758 = vmatprep.subr.mxu0 0.0
        %759 = vmatpush1.msra.mxu0 0.0
        %760 = vmatprep.subr.mxu0 0.0
        %761 = vmatpush1.msra.mxu0 0.0
        %762 = vmatprep.subr.mxu0 0.0
        %763 = vmatpush1.msra.mxu0 0.0
        %764 = vmatprep.subr.mxu0 0.0
        %765 = vmatpush1.msra.mxu0 0.0
        %766 = vmatprep.subr.mxu0 0.0
        %767 = vmatpush1.msra.mxu0 0.0
        %768 = vmatprep.subr.mxu0 0.0
        %769 = vmatpush1.msra.mxu0 0.0
        %770 = vmatprep.subr.mxu0 0.0
        %771 = vmatpush1.msra.mxu0 0.0
        %772 = vmatprep.subr.mxu0 0.0
        %773 = vmatpush1.msra.mxu0 0.0
        %774 = vmatprep.subr.mxu0 0.0
        %775 = vmatpush1.msra.mxu0 0.0
        %776 = vmatprep.subr.mxu0 0.0
        %777 = vmatpush1.msra.mxu0 0.0
        %778 = vmatprep.subr.mxu0 0.0
        %779 = vmatpush1.msra.mxu0 0.0
        %780 = vmatprep.subr.mxu0 0.0
        %781 = vmatpush1.msra.mxu0 0.0
        %782 = vmatprep.subr.mxu0 0.0
        %783 = vmatpush1.msra.mxu0 0.0
        %784 = vmatprep.subr.mxu0 0.0
        %785 = vmatpush1.msra.mxu0 0.0
        %786 = vmatprep.subr.mxu0 0.0
        %787 = vmatpush1.msra.mxu0 0.0
        %788 = vmatprep.subr.mxu0 0.0
        %789 = vmatpush1.msra.mxu0 0.0
        %790 = vmatprep.subr.mxu0 0.0
        %791 = vmatpush1.msra.mxu0 0.0
        %792 = vmatprep.subr.mxu0 0.0
        %793 = vmatpush1.msra.mxu0 0.0
        %794 = vmatprep.subr.mxu0 0.0
        %795 = vmatpush1.msra.mxu0 0.0
        %796 = vmatprep.subr.mxu0 0.0
        %797 = vmatpush1.msra.mxu0 0.0
        %798 = vmatprep.subr.mxu0 0.0
        %799 = vmatpush1.msra.mxu0 0.0
        %800 = vmatprep.subr.mxu0 0.0
        %801 = vmatpush1.msra.mxu0 0.0
        %802 = vmatprep.subr.mxu0 0.0
        %803 = vmatpush1.msra.mxu0 0.0
        %804 = vmatprep.subr.mxu0 0.0
        %805 = vmatpush1.msra.mxu0 0.0
        %806 = vmatprep.subr.mxu0 0.0
        %807 = vmatpush1.msra.mxu0 0.0
        %808 = vmatprep.subr.mxu0 0.0
        %809 = vmatpush1.msra.mxu0 0.0
        %810 = vmatprep.subr.mxu0 0.0
        %811 = vmatpush1.msra.mxu0 0.0
        %812 = vmatprep.subr.mxu0 0.0
        %813 = vmatpush1.msra.mxu0 0.0
        %814 = vmatprep.subr.mxu0 0.0
        %815 = vmatpush1.msra.mxu0 0.0
        %816 = vmatprep.mubr.f32.mxu0 0.0
        %817 = vmatmul.mubr.f32.gmra.mrb[0].mxu0 %v750
        %v818 = vpop.f32.mrb[0].mxu0
        %v819 = vadd.f32 0.0, %v818
        %v820 = vpop.f32.mrb[0].mxu0
        %821 = vdwg.mxu0
        %v822 = vrcp.pop %v744
        %v823 = vmul.f32 %v819, %v822
        %824 = vrot.lane.b32.xlu0 %v492, 112
        %v825 = vpop.permute.xlu0 %824
        %826 = vrot.lane.b32.xlu0 %v495, 112
        %v827 = vpop.permute.xlu0 %826
        %v828 = vsel %vm497, %v825, 0
        %v830 = vsel %vm497, %v827, 0
        %832 = vmatprep.subr.mxu0 0.0
        %833 = vmatpush1.xpose.msra.mxu0 %v830
        %834 = vmatprep.subr.mxu0 0.0
        %835 = vmatpush1.xpose.msra.mxu0 0.0
        %836 = vmatprep.subr.mxu0 0.0
        %837 = vmatpush1.xpose.msra.mxu0 0.0
        %838 = vmatprep.subr.mxu0 0.0
        %839 = vmatpush1.xpose.msra.mxu0 0.0
        %840 = vmatprep.subr.mxu0 0.0
        %841 = vmatpush1.xpose.msra.mxu0 0.0
        %842 = vmatprep.subr.mxu0 0.0
        %843 = vmatpush1.xpose.msra.mxu0 0.0
        %844 = vmatprep.subr.mxu0 0.0
        %845 = vmatpush1.xpose.msra.mxu0 0.0
        %846 = vmatprep.subr.mxu0 0.0
        %847 = vmatpush1.xpose.msra.mxu0 0.0
        %848 = vmatprep.subr.mxu0 0.0
        %849 = vmatpush1.xpose.msra.mxu0 0.0
        %850 = vmatprep.subr.mxu0 0.0
        %851 = vmatpush1.xpose.msra.mxu0 0.0
        %852 = vmatprep.subr.mxu0 0.0
        %853 = vmatpush1.xpose.msra.mxu0 0.0
        %854 = vmatprep.subr.mxu0 0.0
        %855 = vmatpush1.xpose.msra.mxu0 0.0
        %856 = vmatprep.subr.mxu0 0.0
        %857 = vmatpush1.xpose.msra.mxu0 0.0
        %858 = vmatprep.subr.mxu0 0.0
        %859 = vmatpush1.xpose.msra.mxu0 0.0
        %860 = vmatprep.subr.mxu0 0.0
        %861 = vmatpush1.xpose.msra.mxu0 0.0
        %862 = vmatprep.subr.mxu0 0.0
        %863 = vmatpush1.xpose.msra.mxu0 0.0
        %864 = vmatprep.subr.mxu0 0.0
        %865 = vmatpush1.xpose.msra.mxu0 0.0
        %866 = vmatprep.subr.mxu0 0.0
        %867 = vmatpush1.xpose.msra.mxu0 0.0
        %868 = vmatprep.subr.mxu0 0.0
        %869 = vmatpush1.xpose.msra.mxu0 0.0
        %870 = vmatprep.subr.mxu0 0.0
        %871 = vmatpush1.xpose.msra.mxu0 0.0
        %872 = vmatprep.subr.mxu0 0.0
        %873 = vmatpush1.xpose.msra.mxu0 0.0
        %874 = vmatprep.subr.mxu0 0.0
        %875 = vmatpush1.xpose.msra.mxu0 0.0
        %876 = vmatprep.subr.mxu0 0.0
        %877 = vmatpush1.xpose.msra.mxu0 0.0
        %878 = vmatprep.subr.mxu0 0.0
        %879 = vmatpush1.xpose.msra.mxu0 0.0
        %880 = vmatprep.subr.mxu0 0.0
        %881 = vmatpush1.xpose.msra.mxu0 0.0
        %882 = vmatprep.subr.mxu0 0.0
        %883 = vmatpush1.xpose.msra.mxu0 0.0
        %884 = vmatprep.subr.mxu0 0.0
        %885 = vmatpush1.xpose.msra.mxu0 0.0
        %886 = vmatprep.subr.mxu0 0.0
        %887 = vmatpush1.xpose.msra.mxu0 0.0
        %888 = vmatprep.subr.mxu0 0.0
        %889 = vmatpush1.xpose.msra.mxu0 0.0
        %890 = vmatprep.subr.mxu0 0.0
        %891 = vmatpush1.xpose.msra.mxu0 0.0
        %892 = vmatprep.subr.mxu0 0.0
        %893 = vmatpush1.xpose.msra.mxu0 0.0
        %894 = vmatprep.subr.mxu0 0.0
        %895 = vmatpush1.xpose.msra.mxu0 0.0
        %896 = vmatprep.mubr.f32.mxu0 0.0
        %897 = vmatmul.mubr.f32.gmra.mrb[0].mxu0 %v828
        %v898 = vpop.f32.mrb[0].mxu0
        %v899 = vadd.f32 0.0, %v898
        %v900 = vpop.f32.mrb[0].mxu0
        %901 = vdwg.mxu0
        %v902 = vsel %vm497, %v899, -inf
        %903 = vmax.xlane.f32.xlu0 %v902
        %v904 = vpop.xlane.xlu0 %903
        %v905 = vsub.f32 %v899, %v904
        %v906 = vmul.f32 %v905, 1.442695
        %v907 = vpow.pop %v906
        %v908 = vsel %vm497, %v907, 0.0
        %909 = vadd.xlane.f32.xlu0 %v908
        %v910 = vpop.xlane.xlu0 %909
        %911 = vrot.lane.b32.xlu0 %v496, 112
        %v912 = vpop.permute.xlu0 %911
        %v915 = vsel %vm497, %v907, 0
        %917 = vmatprep.subr.mxu0 0.0
        %918 = vmatpush1.msra.mxu0 %v912
        %919 = vmatprep.subr.mxu0 0.0
        %920 = vmatpush1.msra.mxu0 0.0
        %921 = vmatprep.subr.mxu0 0.0
        %922 = vmatpush1.msra.mxu0 0.0
        %923 = vmatprep.subr.mxu0 0.0
        %924 = vmatpush1.msra.mxu0 0.0
        %925 = vmatprep.subr.mxu0 0.0
        %926 = vmatpush1.msra.mxu0 0.0
        %927 = vmatprep.subr.mxu0 0.0
        %928 = vmatpush1.msra.mxu0 0.0
        %929 = vmatprep.subr.mxu0 0.0
        %930 = vmatpush1.msra.mxu0 0.0
        %931 = vmatprep.subr.mxu0 0.0
        %932 = vmatpush1.msra.mxu0 0.0
        %933 = vmatprep.subr.mxu0 0.0
        %934 = vmatpush1.msra.mxu0 0.0
        %935 = vmatprep.subr.mxu0 0.0
        %936 = vmatpush1.msra.mxu0 0.0
        %937 = vmatprep.subr.mxu0 0.0
        %938 = vmatpush1.msra.mxu0 0.0
        %939 = vmatprep.subr.mxu0 0.0
        %940 = vmatpush1.msra.mxu0 0.0
        %941 = vmatprep.subr.mxu0 0.0
        %942 = vmatpush1.msra.mxu0 0.0
        %943 = vmatprep.subr.mxu0 0.0
        %944 = vmatpush1.msra.mxu0 0.0
        %945 = vmatprep.subr.mxu0 0.0
        %946 = vmatpush1.msra.mxu0 0.0
        %947 = vmatprep.subr.mxu0 0.0
        %948 = vmatpush1.msra.mxu0 0.0
        %949 = vmatprep.subr.mxu0 0.0
        %950 = vmatpush1.msra.mxu0 0.0
        %951 = vmatprep.subr.mxu0 0.0
        %952 = vmatpush1.msra.mxu0 0.0
        %953 = vmatprep.subr.mxu0 0.0
        %954 = vmatpush1.msra.mxu0 0.0
        %955 = vmatprep.subr.mxu0 0.0
        %956 = vmatpush1.msra.mxu0 0.0
        %957 = vmatprep.subr.mxu0 0.0
        %958 = vmatpush1.msra.mxu0 0.0
        %959 = vmatprep.subr.mxu0 0.0
        %960 = vmatpush1.msra.mxu0 0.0
        %961 = vmatprep.subr.mxu0 0.0
        %962 = vmatpush1.msra.mxu0 0.0
        %963 = vmatprep.subr.mxu0 0.0
        %964 = vmatpush1.msra.mxu0 0.0
        %965 = vmatprep.subr.mxu0 0.0
        %966 = vmatpush1.msra.mxu0 0.0
        %967 = vmatprep.subr.mxu0 0.0
        %968 = vmatpush1.msra.mxu0 0.0
        %969 = vmatprep.subr.mxu0 0.0
        %970 = vmatpush1.msra.mxu0 0.0
        %971 = vmatprep.subr.mxu0 0.0
        %972 = vmatpush1.msra.mxu0 0.0
        %973 = vmatprep.subr.mxu0 0.0
        %974 = vmatpush1.msra.mxu0 0.0
        %975 = vmatprep.subr.mxu0 0.0
        %976 = vmatpush1.msra.mxu0 0.0
        %977 = vmatprep.subr.mxu0 0.0
        %978 = vmatpush1.msra.mxu0 0.0
        %979 = vmatprep.subr.mxu0 0.0
        %980 = vmatpush1.msra.mxu0 0.0
        %981 = vmatprep.mubr.f32.mxu0 0.0
        %982 = vmatmul.mubr.f32.gmra.mrb[0].mxu0 %v915
        %v983 = vpop.f32.mrb[0].mxu0
        %v984 = vadd.f32 0.0, %v983
        %v985 = vpop.f32.mrb[0].mxu0
        %986 = vdwg.mxu0
        %v987 = vrcp.pop %v910
        %v988 = vmul.f32 %v984, %v987
        %989 = vrot.lane.b32.xlu0 %v492, 104
        %v990 = vpop.permute.xlu0 %989
        %991 = vrot.lane.b32.xlu0 %v495, 104
        %v992 = vpop.permute.xlu0 %991
        %v993 = vsel %vm497, %v990, 0
        %v995 = vsel %vm497, %v992, 0
        %997 = vmatprep.subr.mxu0 0.0
        %998 = vmatpush1.xpose.msra.mxu0 %v995
        %999 = vmatprep.subr.mxu0 0.0
        %1000 = vmatpush1.xpose.msra.mxu0 0.0
        %1001 = vmatprep.subr.mxu0 0.0
        %1002 = vmatpush1.xpose.msra.mxu0 0.0
        %1003 = vmatprep.subr.mxu0 0.0
        %1004 = vmatpush1.xpose.msra.mxu0 0.0
        %1005 = vmatprep.subr.mxu0 0.0
        %1006 = vmatpush1.xpose.msra.mxu0 0.0
        %1007 = vmatprep.subr.mxu0 0.0
        %1008 = vmatpush1.xpose.msra.mxu0 0.0
        %1009 = vmatprep.subr.mxu0 0.0
        %1010 = vmatpush1.xpose.msra.mxu0 0.0
        %1011 = vmatprep.subr.mxu0 0.0
        %1012 = vmatpush1.xpose.msra.mxu0 0.0
        %1013 = vmatprep.subr.mxu0 0.0
        %1014 = vmatpush1.xpose.msra.mxu0 0.0
        %1015 = vmatprep.subr.mxu0 0.0
        %1016 = vmatpush1.xpose.msra.mxu0 0.0
        %1017 = vmatprep.subr.mxu0 0.0
        %1018 = vmatpush1.xpose.msra.mxu0 0.0
        %1019 = vmatprep.subr.mxu0 0.0
        %1020 = vmatpush1.xpose.msra.mxu0 0.0
        %1021 = vmatprep.subr.mxu0 0.0
        %1022 = vmatpush1.xpose.msra.mxu0 0.0
        %1023 = vmatprep.subr.mxu0 0.0
        %1024 = vmatpush1.xpose.msra.mxu0 0.0
        %1025 = vmatprep.subr.mxu0 0.0
        %1026 = vmatpush1.xpose.msra.mxu0 0.0
        %1027 = vmatprep.subr.mxu0 0.0
        %1028 = vmatpush1.xpose.msra.mxu0 0.0
        %1029 = vmatprep.subr.mxu0 0.0
        %1030 = vmatpush1.xpose.msra.mxu0 0.0
        %1031 = vmatprep.subr.mxu0 0.0
        %1032 = vmatpush1.xpose.msra.mxu0 0.0
        %1033 = vmatprep.subr.mxu0 0.0
        %1034 = vmatpush1.xpose.msra.mxu0 0.0
        %1035 = vmatprep.subr.mxu0 0.0
        %1036 = vmatpush1.xpose.msra.mxu0 0.0
        %1037 = vmatprep.subr.mxu0 0.0
        %1038 = vmatpush1.xpose.msra.mxu0 0.0
        %1039 = vmatprep.subr.mxu0 0.0
        %1040 = vmatpush1.xpose.msra.mxu0 0.0
        %1041 = vmatprep.subr.mxu0 0.0
        %1042 = vmatpush1.xpose.msra.mxu0 0.0
        %1043 = vmatprep.subr.mxu0 0.0
        %1044 = vmatpush1.xpose.msra.mxu0 0.0
        %1045 = vmatprep.subr.mxu0 0.0
        %1046 = vmatpush1.xpose.msra.mxu0 0.0
        %1047 = vmatprep.subr.mxu0 0.0
        %1048 = vmatpush1.xpose.msra.mxu0 0.0
        %1049 = vmatprep.subr.mxu0 0.0
        %1050 = vmatpush1.xpose.msra.mxu0 0.0
        %1051 = vmatprep.subr.mxu0 0.0
        %1052 = vmatpush1.xpose.msra.mxu0 0.0
        %1053 = vmatprep.subr.mxu0 0.0
        %1054 = vmatpush1.xpose.msra.mxu0 0.0
        %1055 = vmatprep.subr.mxu0 0.0
        %1056 = vmatpush1.xpose.msra.mxu0 0.0
        %1057 = vmatprep.subr.mxu0 0.0
        %1058 = vmatpush1.xpose.msra.mxu0 0.0
        %1059 = vmatprep.subr.mxu0 0.0
        %1060 = vmatpush1.xpose.msra.mxu0 0.0
        %1061 = vmatprep.mubr.f32.mxu0 0.0
        %1062 = vmatmul.mubr.f32.gmra.mrb[0].mxu0 %v993
        %v1063 = vpop.f32.mrb[0].mxu0
        %v1064 = vadd.f32 0.0, %v1063
        %v1065 = vpop.f32.mrb[0].mxu0
        %1066 = vdwg.mxu0
        %v1067 = vsel %vm497, %v1064, -inf
        %1068 = vmax.xlane.f32.xlu0 %v1067
        %v1069 = vpop.xlane.xlu0 %1068
        %v1070 = vsub.f32 %v1064, %v1069
        %v1071 = vmul.f32 %v1070, 1.442695
        %v1072 = vpow.pop %v1071
        %v1073 = vsel %vm497, %v1072, 0.0
        %1074 = vadd.xlane.f32.xlu0 %v1073
        %v1075 = vpop.xlane.xlu0 %1074
        %1076 = vrot.lane.b32.xlu0 %v496, 104
        %v1077 = vpop.permute.xlu0 %1076
        %v1080 = vsel %vm497, %v1072, 0
        %1082 = vmatprep.subr.mxu0 0.0
        %1083 = vmatpush1.msra.mxu0 %v1077
        %1084 = vmatprep.subr.mxu0 0.0
        %1085 = vmatpush1.msra.mxu0 0.0
        %1086 = vmatprep.subr.mxu0 0.0
        %1087 = vmatpush1.msra.mxu0 0.0
        %1088 = vmatprep.subr.mxu0 0.0
        %1089 = vmatpush1.msra.mxu0 0.0
        %1090 = vmatprep.subr.mxu0 0.0
        %1091 = vmatpush1.msra.mxu0 0.0
        %1092 = vmatprep.subr.mxu0 0.0
        %1093 = vmatpush1.msra.mxu0 0.0
        %1094 = vmatprep.subr.mxu0 0.0
        %1095 = vmatpush1.msra.mxu0 0.0
        %1096 = vmatprep.subr.mxu0 0.0
        %1097 = vmatpush1.msra.mxu0 0.0
        %1098 = vmatprep.subr.mxu0 0.0
        %1099 = vmatpush1.msra.mxu0 0.0
        %1100 = vmatprep.subr.mxu0 0.0
        %1101 = vmatpush1.msra.mxu0 0.0
        %1102 = vmatprep.subr.mxu0 0.0
        %1103 = vmatpush1.msra.mxu0 0.0
        %1104 = vmatprep.subr.mxu0 0.0
        %1105 = vmatpush1.msra.mxu0 0.0
        %1106 = vmatprep.subr.mxu0 0.0
        %1107 = vmatpush1.msra.mxu0 0.0
        %1108 = vmatprep.subr.mxu0 0.0
        %1109 = vmatpush1.msra.mxu0 0.0
        %1110 = vmatprep.subr.mxu0 0.0
        %1111 = vmatpush1.msra.mxu0 0.0
        %1112 = vmatprep.subr.mxu0 0.0
        %1113 = vmatpush1.msra.mxu0 0.0
        %1114 = vmatprep.subr.mxu0 0.0
        %1115 = vmatpush1.msra.mxu0 0.0
        %1116 = vmatprep.subr.mxu0 0.0
        %1117 = vmatpush1.msra.mxu0 0.0
        %1118 = vmatprep.subr.mxu0 0.0
        %1119 = vmatpush1.msra.mxu0 0.0
        %1120 = vmatprep.subr.mxu0 0.0
        %1121 = vmatpush1.msra.mxu0 0.0
        %1122 = vmatprep.subr.mxu0 0.0
        %1123 = vmatpush1.msra.mxu0 0.0
        %1124 = vmatprep.subr.mxu0 0.0
        %1125 = vmatpush1.msra.mxu0 0.0
        %1126 = vmatprep.subr.mxu0 0.0
        %1127 = vmatpush1.msra.mxu0 0.0
        %1128 = vmatprep.subr.mxu0 0.0
        %1129 = vmatpush1.msra.mxu0 0.0
        %1130 = vmatprep.subr.mxu0 0.0
        %1131 = vmatpush1.msra.mxu0 0.0
        %1132 = vmatprep.subr.mxu0 0.0
        %1133 = vmatpush1.msra.mxu0 0.0
        %1134 = vmatprep.subr.mxu0 0.0
        %1135 = vmatpush1.msra.mxu0 0.0
        %1136 = vmatprep.subr.mxu0 0.0
        %1137 = vmatpush1.msra.mxu0 0.0
        %1138 = vmatprep.subr.mxu0 0.0
        %1139 = vmatpush1.msra.mxu0 0.0
        %1140 = vmatprep.subr.mxu0 0.0
        %1141 = vmatpush1.msra.mxu0 0.0
        %1142 = vmatprep.subr.mxu0 0.0
        %1143 = vmatpush1.msra.mxu0 0.0
        %1144 = vmatprep.subr.mxu0 0.0
        %1145 = vmatpush1.msra.mxu0 0.0
        %1146 = vmatprep.mubr.f32.mxu0 0.0
        %1147 = vmatmul.mubr.f32.gmra.mrb[0].mxu0 %v1080
        %v1148 = vpop.f32.mrb[0].mxu0
        %v1149 = vadd.f32 0.0, %v1148
        %v1150 = vpop.f32.mrb[0].mxu0
        %1151 = vdwg.mxu0
        %v1152 = vrcp.pop %v1075
        %v1153 = vmul.f32 %v1149, %v1152
        %1155 = vrot.lane.b32.xlu0 %v823, 8
        %v1156 = vpop.permute.xlu0 %1155
        %1159 = vrot.lane.b32.xlu0 %v988, 16
        %v1160 = vpop.permute.xlu0 %1159
        %1163 = vrot.lane.b32.xlu0 %v1153, 24
        %v1164 = vpop.permute.xlu0 %1163
        %v1166 = vsel %vm497, %v657, %v1156
        %vm1167 = vcmask 130048
        %v1168 = vsel %vm1167, %v1166, %v1160
        %vm1169 = vcmask 195584
        %v1170 = vsel %vm1169, %v1168, %v1164
        %1171 = vst.msk [vmem:[%s214] sm:$0xff] %vm421, %v1170
        %s1172 = sand.u32 %s111, 1
        %s1173 = scalar_lea.sflag [#allocation6], %s1172
        %s1174 = sand.u32 %s111, 1
        %s1175 = smul.addr %s1174, 8
        %s1176 = scalar_lea.vmem [#allocation9], %s1175
        // Predicated region
        $region45: #{tpu_custom_call.1} parent=31 // pred_check
          %p1177 = pneg %p121
        $region46: #{tpu_custom_call.1} parent=31 // pred_check_branch
          %1179 = sbr.rel (%p1177) target = $region48
        $region47: #{tpu_custom_call.1} parent=31 // pred_region
          %s1181 = ssub.s32 128, 128
          %1182 = vsyncadd %s1173, %s1181
          %s1183 = sadd.s32 %s26, %s25
          %s1184 = smul.addr %s1183, 128
          %s1185 = scalar_lea.hbm %s3, %s1184
          %s1187 = sshll.u32 %s1176, 4
          %s1188 = int_to_ptr.vmem [resolvable:$true] %s1187
          %1190 = dma.vmem_to_hbm [thread:$0]  %s1188, 128, %s1185, %s1173
        $region48: #{tpu_custom_call.1} parent=31 // pred_fallthru
          _
      $region32: #{tpu_custom_call.1} parent=5 // pred_fallthru
        _
      %p1191 = scmp.le.s32.totalorder 2, %s16
      // Predicated region
      $region49: #{tpu_custom_call.1} parent=5 // pred_check
        %p1192 = pneg %p1191
      $region50: #{tpu_custom_call.1} parent=5 // pred_check_branch
        %1194 = sbr.rel (%p1192) target = $region52
      $region51: #{tpu_custom_call.1} parent=5 // pred_region
        %s1195 = ssub.s32 %s16, 2
        // Predicated region
        $region53: #{tpu_custom_call.1} parent=51 // pred_check
          %p1196 = pneg %p127
        $region54: #{tpu_custom_call.1} parent=51 // pred_check_branch
          %1198 = sbr.rel (%p1196) target = $region56
        $region55: #{tpu_custom_call.1} parent=51 // pred_region
          %s1199 = sand.u32 %s112, 1
          %s1200 = scalar_lea.sflag [#allocation6], %s1199
          %s1201 = sand.u32 %s112, 1
          %s1202 = smul.addr %s1201, 8
          %s1203 = scalar_lea.vmem [#allocation9], %s1202
          %1204 = dma.done %s1200, 128
        $region56: #{tpu_custom_call.1} parent=51 // pred_fallthru
          _
      $region52: #{tpu_custom_call.1} parent=5 // pred_fallthru
        _
    $region6: #{tpu_custom_call.1} parent=1 // loop_footer
      %s20 = sadd.s32 1, %s16
    $region7: #{tpu_custom_call.1} parent=1 // loop_footer_branch
      %15 = sbr.rel target = $region3
    $region8: #{tpu_custom_call.1} parent=1 // loop_exit
      _
    %1205 = vsyncpa [#allocation5], 1
    %s1206 = scalar_lea.sflag [#allocation5], 1
    %1207 = vsyncpa %s1206, 1
    %1208 = vsyncpa [#allocation8], 1
    %1209 = vsyncpa [#allocation6], 1
    %s1210 = scalar_lea.sflag [#allocation6], 1
    %1211 = vsyncpa %s1210, 1

</llo_original>
